<compile_context>
chip_gen: v6e
topology: v6e:2x2x1
jax: 0.10.0
libtpu: 0.0.40
codegen_flags: <defaults>
</compile_context>

<pallas_src>
import math
import functools

import jax
import jax.numpy as jnp
from jax.experimental import pallas as pl
from jax.experimental.pallas import tpu as pltpu

NEG_SLOPE = 0.01                      # nn.LeakyReLU default
BN_EPS = 1e-5                         # nn.BatchNorm2d default
LANE = 128                            # MXU / lane width padding for operands
TM_TARGET = 1024                      # target M-tile (rows)
RESIDENT_LIMIT = 16 * 1024 * 1024     # max VMEM-resident output for fused BN path


# ------------------------------ small helpers ------------------------------ #

def _round_up(n, m):
    return ((n + m - 1) // m) * m


def _lane_pad(c):
    return _round_up(c, LANE)


def _cdiv(a, b):
    return -(-a // b)


def _choose_m_tiling(m):
    """Balanced tiling: (tile_m, padded_m, ntiles), tile_m % 8 == 0."""
    ntiles = max(1, _cdiv(m, TM_TARGET))
    tm = _round_up(_cdiv(m, ntiles), 8)
    return tm, tm * ntiles, ntiles


def _vmem_limit(*component_bytes):
    est = int(sum(component_bytes)) + (4 << 20)
    return int(min(max(est, 8 << 20), 48 << 20))   # stays under v7x's 64 MiB


def _prep_operands(a, w, b, mp, kp, np_):
    """Pad A->(mp,kp), W->(kp,np_) in bf16 and FOLD THE BIAS into the matmul:
    column k of A is all-ones, row k of W holds the bias."""
    m, k = a.shape
    cout = w.shape[1]
    a_p = jnp.zeros((mp, kp), jnp.bfloat16)
    a_p = a_p.at[:m, :k].set(a.astype(jnp.bfloat16))
    a_p = a_p.at[:, k].set(jnp.asarray(1.0, jnp.bfloat16))
    w_p = jnp.zeros((kp, np_), jnp.bfloat16)
    w_p = w_p.at[:k, :cout].set(w.astype(jnp.bfloat16))
    w_p = w_p.at[k, :cout].set(b.astype(jnp.bfloat16))
    return a_p, w_p


# ----------------------- conv-as-matmul (+ activation) --------------------- #

def _matmul_act_kernel(act, cout, a_ref, w_ref, o_ref):
    acc = jnp.dot(a_ref[...], w_ref[...], preferred_element_type=jnp.float32)
    acc = acc[:, :cout]                          # keep only real channels
    if act == "lrelu":
        acc = jnp.where(acc >= 0, acc, NEG_SLOPE * acc)
    elif act == "sigmoid":
        acc = 1.0 / (1.0 + jnp.exp(-acc))
    o_ref[...] = acc


def matmul_bias_act(a, w, b, act):
    """a:(M,K), w:(K,Cout), b:(Cout,) -> (M,Cout) f32 (bf16 matmul, f32 epilogue)."""
    m, k = a.shape
    cout = w.shape[1]
    kp = _round_up(k + 1, LANE)                  # +1 column carries folded bias
    np_ = _lane_pad(cout)
    tm, mp, ntiles = _choose_m_tiling(m)
    a_p, w_p = _prep_operands(a, w, b, mp, kp, np_)

    cost = pl.CostEstimate(
        flops=2 * mp * kp * np_,
        transcendentals=mp * cout if act == "sigmoid" else 0,
        bytes_accessed=a_p.size * 2 + w_p.size * 2 + mp * cout * 4)

    out = pl.pallas_call(
        functools.partial(_matmul_act_kernel, act, cout),
        out_shape=jax.ShapeDtypeStruct((mp, cout), jnp.float32),
        grid=(ntiles,),
        in_specs=[pl.BlockSpec((tm, kp), lambda i: (i, 0)),
                  pl.BlockSpec((kp, np_), lambda i: (0, 0))],
        out_specs=pl.BlockSpec((tm, cout), lambda i: (i, 0)),
        compiler_params=pltpu.CompilerParams(
            dimension_semantics=("parallel",),
            vmem_limit_bytes=_vmem_limit(4 * tm * kp, 4 * kp * np_,
                                         8 * tm * _lane_pad(cout))),
        cost_estimate=cost,
    )(a_p, w_p)
    return out[:m]


# --------------- fused conv + BatchNorm + LeakyReLU (+ head) --------------- #

def _conv_bn_lrelu_kernel(tm, m_real, cout, has_head, *refs):
    if has_head:
        a_ref, w_ref, g_ref, b_ref, wh_ref, bh_ref, out_ref, z_ref = refs
    else:
        a_ref, w_ref, g_ref, b_ref, z_ref = refs

    i = pl.program_id(0)
    acc = jnp.dot(a_ref[...], w_ref[...], preferred_element_type=jnp.float32)
    row0 = pl.multiple_of(i * tm, 8)
    z_ref[pl.ds(row0, tm), :] = acc[:, :cout]    # stash raw conv+bias tile

    @pl.when(i == pl.num_programs(0) - 1)
    def _():
        y = z_ref[...]                                        # (mp, cout) f32
        rows = jax.lax.broadcasted_iota(jnp.int32, (y.shape[0], 1), 0)
        valid = (rows < m_real).astype(jnp.float32)           # mask padded rows
        inv_m = 1.0 / float(m_real)
        mean = jnp.sum(y * valid, axis=0, keepdims=True) * inv_m
        d = (y - mean) * valid
        var = jnp.sum(d * d, axis=0, keepdims=True) * inv_m   # exact two-pass
        scale = jax.lax.rsqrt(var + BN_EPS) * g_ref[...]
        shift = b_ref[...] - mean * scale
        z = y * scale + shift
        z = jnp.where(z >= 0, z, NEG_SLOPE * z)
        if has_head:
            # Fused 1x1 conv + sigmoid head (row-wise, no HBM write of z).
            h = jnp.sum(z * wh_ref[...], axis=1, keepdims=True) + bh_ref[...]
            out_ref[...] = 1.0 / (1.0 + jnp.exp(-h))
        else:
            z_ref[...] = z


def _conv_bn_lrelu_fused(a_p, w_p, g2, be2, head, m, cout, tm, mp, ntiles, kp, np_):
    has_head = head is not None
    inputs = [a_p, w_p, g2, be2]
    in_specs = [pl.BlockSpec((tm, kp), lambda i: (i, 0)),
                pl.BlockSpec((kp, np_), lambda i: (0, 0)),
                pl.BlockSpec((1, cout), lambda i: (0, 0)),
                pl.BlockSpec((1, cout), lambda i: (0, 0))]
    scratch = []
    vmem_parts = [4 * tm * kp, 4 * kp * np_, 2 * mp * _lane_pad(cout) * 4]
    if has_head:
        wh2, bh2 = head
        inputs += [wh2, bh2]
        in_specs += [pl.BlockSpec((1, cout), lambda i: (0, 0)),
                     pl.BlockSpec((1, 1), lambda i: (0, 0))]
        out_shape = jax.ShapeDtypeStruct((mp, 1), jnp.float32)
        out_specs = pl.BlockSpec((mp, 1), lambda i: (0, 0))
        scratch = [pltpu.VMEM((mp, cout), jnp.float32)]       # z stays on-chip
        vmem_parts.append(2 * mp * LANE * 4)
        out_bytes, trans = mp * 4, mp
    else:
        out_shape = jax.ShapeDtypeStruct((mp, cout), jnp.float32)
        out_specs = pl.BlockSpec((mp, cout), lambda i: (0, 0))
        out_bytes, trans = mp * cout * 4, 0

    cost = pl.CostEstimate(
        flops=2 * mp * kp * np_ + 10 * mp * cout,
        transcendentals=trans + cout,
        bytes_accessed=a_p.size * 2 + w_p.size * 2 + out_bytes + 4 * cout * 4)

    out = pl.pallas_call(
        functools.partial(_conv_bn_lrelu_kernel, tm, m, cout, has_head),
        out_shape=out_shape,
        grid=(ntiles,),
        in_specs=in_specs,
        out_specs=out_specs,
        scratch_shapes=scratch,
        compiler_params=pltpu.CompilerParams(
            dimension_semantics=("arbitrary",),   # resident output + batch stats
            vmem_limit_bytes=_vmem_limit(*vmem_parts)),
        cost_estimate=cost,
    )(*inputs)
    return out[:m]


# --------- fallback two-pass path (only when resident y would not fit) ------ #

def _bn_pass1_kernel(tm, m_real, cout, a_ref, w_ref, y_ref, sum_ref, ssq_ref):
    i = pl.program_id(0)

    @pl.when(i == 0)
    def _():
        sum_ref[...] = jnp.zeros_like(sum_ref)
        ssq_ref[...] = jnp.zeros_like(ssq_ref)

    acc = jnp.dot(a_ref[...], w_ref[...], preferred_element_type=jnp.float32)
    acc = acc[:, :cout]
    y_ref[...] = acc.astype(y_ref.dtype)          # bf16 intermediate (halved bytes)
    row = i * tm + jax.lax.broadcasted_iota(jnp.int32, acc.shape, 0)
    am = jnp.where(row < m_real, acc, 0.0)
    # TODO(synk): E[x^2]-E[x]^2 can cancel for large activation means; the
    # resident fused path above uses an exact two-pass variance instead.
    sum_ref[...] += jnp.sum(am, axis=0, keepdims=True)
    ssq_ref[...] += jnp.sum(am * am, axis=0, keepdims=True)


def _bn_pass2_kernel(m_real, has_head, *refs):
    if has_head:
        y_ref, sum_ref, ssq_ref, g_ref, b_ref, wh_ref, bh_ref, o_ref = refs
    else:
        y_ref, sum_ref, ssq_ref, g_ref, b_ref, o_ref = refs
    inv_m = 1.0 / float(m_real)
    mean = sum_ref[...] * inv_m
    var = jnp.maximum(ssq_ref[...] * inv_m - mean * mean, 0.0)
    scale = jax.lax.rsqrt(var + BN_EPS) * g_ref[...]
    shift = b_ref[...] - mean * scale
    z = y_ref[...].astype(jnp.float32) * scale + shift
    z = jnp.where(z >= 0, z, NEG_SLOPE * z)
    if has_head:
        h = jnp.sum(z * wh_ref[...], axis=1, keepdims=True) + bh_ref[...]
        o_ref[...] = 1.0 / (1.0 + jnp.exp(-h))
    else:
        o_ref[...] = z


def _conv_bn_lrelu_twopass(a_p, w_p, g2, be2, head, m, cout, tm, mp, ntiles, kp, np_):
    has_head = head is not None
    y_p, s_sum, s_ssq = pl.pallas_call(
        functools.partial(_bn_pass1_kernel, tm, m, cout),
        out_shape=(jax.ShapeDtypeStruct((mp, cout), jnp.bfloat16),
                   jax.ShapeDtypeStruct((1, cout), jnp.float32),
                   jax.ShapeDtypeStruct((1, cout), jnp.float32)),
        grid=(ntiles,),
        in_specs=[pl.BlockSpec((tm, kp), lambda i: (i, 0)),
                  pl.BlockSpec((kp, np_), lambda i: (0, 0))],
        out_specs=(pl.BlockSpec((tm, cout), lambda i: (i, 0)),
                   pl.BlockSpec((1, cout), lambda i: (0, 0)),
                   pl.BlockSpec((1, cout), lambda i: (0, 0))),
        compiler_params=pltpu.CompilerParams(
            dimension_semantics=("arbitrary",),
            vmem_limit_bytes=_vmem_limit(4 * tm * kp, 4 * kp * np_,
                                         4 * tm * _lane_pad(cout))),
    )(a_p, w_p)

    inputs = [y_p, s_sum, s_ssq, g2, be2]
    in_specs = ([pl.BlockSpec((tm, cout), lambda i: (i, 0))]
                + [pl.BlockSpec((1, cout), lambda i: (0, 0))] * 4)
    if has_head:
        wh2, bh2 = head
        inputs += [wh2, bh2]
        in_specs += [pl.BlockSpec((1, cout), lambda i: (0, 0)),
                     pl.BlockSpec((1, 1), lambda i: (0, 0))]
        out_cols = 1
    else:
        out_cols = cout
    out = pl.pallas_call(
        functools.partial(_bn_pass2_kernel, m, has_head),
        out_shape=jax.ShapeDtypeStruct((mp, out_cols), jnp.float32),
        grid=(ntiles,),
        in_specs=in_specs,
        out_specs=pl.BlockSpec((tm, out_cols), lambda i: (i, 0)),
        compiler_params=pltpu.CompilerParams(
            dimension_semantics=("parallel",),
            vmem_limit_bytes=_vmem_limit(4 * tm * _lane_pad(cout),
                                         8 * tm * _lane_pad(out_cols))),
    )(*inputs)
    return out[:m]


def conv_bn_lrelu(a, w, b, gamma, beta, head=None):
    """Fused conv(im2col matmul) + bias + BatchNorm2d(train) + LeakyReLU,
    optionally followed by a fused 1x1-conv + sigmoid head (returns (M,1))."""
    m, k = a.shape
    cout = w.shape[1]
    kp = _round_up(k + 1, LANE)
    np_ = _lane_pad(cout)
    tm, mp, ntiles = _choose_m_tiling(m)
    a_p, w_p = _prep_operands(a, w, b, mp, kp, np_)
    g2 = gamma.reshape(1, cout).astype(jnp.float32)
    be2 = beta.reshape(1, cout).astype(jnp.float32)
    head2 = None
    if head is not None:
        wh, bh = head
        head2 = (wh.reshape(1, cout).astype(jnp.float32),
                 bh.reshape(1, 1).astype(jnp.float32))

    resident = mp * _lane_pad(cout) * 4 + (mp * LANE * 4 if head is not None else 0)
    if resident <= RESIDENT_LIMIT:
        return _conv_bn_lrelu_fused(a_p, w_p, g2, be2, head2,
                                    m, cout, tm, mp, ntiles, kp, np_)
    return _conv_bn_lrelu_twopass(a_p, w_p, g2, be2, head2,
                                  m, cout, tm, mp, ntiles, kp, np_)


# ------------------------------- JAX glue ---------------------------------- #

def im2col(x_nhwc, k, stride, pad):
    """(N,H,W,C) -> (N*OH*OW, K*K*C) patch matrix, plus (OH, OW)."""
    if pad:
        x_nhwc = jnp.pad(x_nhwc, ((0, 0), (pad, pad), (pad, pad), (0, 0)))
    n, h, w, c = x_nhwc.shape
    oh = (h - k) // stride + 1
    ow = (w - k) // stride + 1
    cols = []
    for i in range(k):
        for j in range(k):
            cols.append(x_nhwc[:, i:i + stride * oh:stride, j:j + stride * ow:stride, :])
    cols = jnp.stack(cols, axis=3)                     # (N, OH, OW, K*K, C)
    return cols.reshape(n * oh * ow, k * k * c), oh, ow


def build_dccritic(key, img=4, base=4):
    """Mirror DCCritic._build_topology / _init_weights with deterministic init."""
    nblocks = math.log2(img)
    assert nblocks == int(nblocks), "img must be a power of 2"
    nblocks = int(nblocks)

    cfgs = [dict(k=9, s=1, p=4, cin=3, cout=base, post="lrelu")]
    in_chan, double = base, False
    for _ in range(nblocks):
        out_chan = in_chan * 2 if double else in_chan
        cfgs.append(dict(k=4, s=2, p=0, cin=in_chan, cout=out_chan, post="bn_lrelu"))
        in_chan = out_chan
        double = not double
    cfgs.append(dict(k=1, s=1, p=0, cin=in_chan, cout=1, post="sigmoid"))

    params = []
    for cfg in cfgs:
        key, kw_, kb_ = jax.random.split(key, 3)
        fan_in = cfg["cin"] * cfg["k"] * cfg["k"]
        std = math.sqrt(2.0 / fan_in)                  # kaiming_normal_ (fan_in, a=0)
        w = std * jax.random.normal(
            kw_, (cfg["k"], cfg["k"], cfg["cin"], cfg["cout"]), jnp.float32)
        bound = 1.0 / math.sqrt(fan_in)                # default Conv2d bias init
        b = jax.random.uniform(kb_, (cfg["cout"],), jnp.float32, -bound, bound)
        p = dict(w=w, b=b)
        if cfg["post"] == "bn_lrelu":                  # BatchNorm2d default affine init
            p["gamma"] = jnp.ones((cfg["cout"],), jnp.float32)
            p["beta"] = jnp.zeros((cfg["cout"],), jnp.float32)
        params.append(p)
    return cfgs, params


def dccritic_forward(x_nchw, cfgs, params):
    x = jnp.transpose(x_nchw, (0, 2, 3, 1)).astype(jnp.float32)   # NCHW -> NHWC
    n = x.shape[0]
    idx = 0
    while idx < len(cfgs):
        cfg, p = cfgs[idx], params[idx]
        a, oh, ow = im2col(x.astype(jnp.bfloat16), cfg["k"], cfg["s"], cfg["p"])
        w2 = p["w"].reshape(cfg["k"] * cfg["k"] * cfg["cin"], cfg["cout"])
        if cfg["post"] == "bn_lrelu":
            # Fuse a directly-following 1x1-conv + sigmoid head into this layer.
            fuse_head = (idx + 1 < len(cfgs)
                         and cfgs[idx + 1]["post"] == "sigmoid"
                         and cfgs[idx + 1]["k"] == 1 and cfgs[idx + 1]["s"] == 1)
            if fuse_head:
                ph = params[idx + 1]
                head = (ph["w"].reshape(1, cfg["cout"]), ph["b"].reshape(1, 1))
                y = conv_bn_lrelu(a, w2, p["b"], p["gamma"], p["beta"], head=head)
                x = y.reshape(n, oh, ow, 1)
                idx += 2
                continue
            y = conv_bn_lrelu(a, w2, p["b"], p["gamma"], p["beta"])
        else:                                          # "lrelu" or (unfused) "sigmoid"
            y = matmul_bias_act(a, w2, p["b"], cfg["post"])
        x = y.reshape(n, oh, ow, cfg["cout"])
        idx += 1
    return jnp.transpose(x, (0, 3, 1, 2))              # back to NCHW


# --------------------------------- demo ------------------------------------ #

if __name__ == "__main__":
    key = jax.random.PRNGKey(0)
    k_x, k_p = jax.random.split(key)

    cfgs, params = build_dccritic(k_p, img=4, base=4)
    x = jax.random.normal(k_x, (2, 3, 16, 16), jnp.float32)        # NCHW like PyTorch

    out = jax.jit(lambda xx: dccritic_forward(xx, cfgs, params))(x)
    jax.block_until_ready(out)

    assert out.shape == (2, 1, 2, 2), out.shape
    assert bool(jnp.all(jnp.isfinite(out)))
    assert bool(jnp.all((out >= 0.0) & (out <= 1.0)))               # sigmoid range
    print("KERNEL_OK")
</pallas_src>

<mosaic_0001>
module attributes {stable_mosaic.version = 11 : i64} {
  func.func @_matmul_act_kernel(%arg0: i32, %arg1: memref<512x256xbf16, #tpu.memory_space<vmem>>, %arg2: memref<256x128xbf16, #tpu.memory_space<vmem>>, %arg3: memref<512x4xf32, #tpu.memory_space<vmem>>) attributes {dimension_semantics = [#tpu.dimension_semantics<parallel>], iteration_bounds = array<i64: 1>, scalar_prefetch = 0 : i64, scratch_operands = 0 : i64, tpu.core_type = #tpu.core_type<tc>, window_params = [{transform_indices = @transform_0, window_bounds = array<i64: 512, 256>}, {pipeline_mode = #tpu.pipeline_mode<synchronous>, transform_indices = @transform_1, window_bounds = array<i64: 256, 128>}, {transform_indices = @transform_2, window_bounds = array<i64: 512, 4>}]} {
    %c0 = arith.constant 0 : index
    %c0_0 = arith.constant 0 : index
    %0 = vector.load %arg1[%c0, %c0_0] : memref<512x256xbf16, #tpu.memory_space<vmem>>, vector<512x256xbf16>
    %c0_1 = arith.constant 0 : index
    %c0_2 = arith.constant 0 : index
    %1 = vector.load %arg2[%c0_1, %c0_2] : memref<256x128xbf16, #tpu.memory_space<vmem>>, vector<256x128xbf16>
    %cst = arith.constant dense<0.000000e+00> : vector<512x128xf32>
    %2 = tpu.matmul %0, %1, %cst {dimension_numbers = #tpu.dot_dimension_numbers<[1], [0], [0], [1], [0, 0, 1, 1], [], []>} : vector<512x256xbf16>, vector<256x128xbf16>, vector<512x128xf32> -> vector<512x128xf32>
    %3 = vector.extract_strided_slice %2 {offsets = [0, 0], sizes = [512, 4], strides = [1, 1]} : vector<512x128xf32> to vector<512x4xf32>
    %cst_3 = arith.constant 0.000000e+00 : f32
    %4 = vector.broadcast %cst_3 : f32 to vector<512x4xf32>
    %5 = arith.cmpf oge, %3, %4 : vector<512x4xf32>
    %cst_4 = arith.constant 0.00999999977 : f32
    %6 = vector.broadcast %cst_4 : f32 to vector<512x4xf32>
    %7 = arith.mulf %6, %3 : vector<512x4xf32>
    %8 = arith.select %5, %3, %7 : vector<512x4xi1>, vector<512x4xf32>
    %c0_5 = arith.constant 0 : index
    %c0_6 = arith.constant 0 : index
    %9 = vector.load %arg3[%c0_5, %c0_6] : memref<512x4xf32, #tpu.memory_space<vmem>>, vector<512x4xf32>
    tpu.vector_store %arg3[%c0_5, %c0_6], %8 {strides = array<i32>} : memref<512x4xf32, #tpu.memory_space<vmem>>, vector<512x4xf32>,
    return
  }
  func.func @transform_0(%arg0: i32) -> (i32, i32) {
    %c0_i32 = arith.constant 0 : i32
    %c0_i32_0 = arith.constant 0 : i32
    return %arg0, %c0_i32 : i32, i32
  }
  func.func @transform_1(%arg0: i32) -> (i32, i32) {
    %c0_i32 = arith.constant 0 : i32
    %c0_i32_0 = arith.constant 0 : i32
    %c0_i32_1 = arith.constant 0 : i32
    return %c0_i32, %c0_i32_0 : i32, i32
  }
  func.func @transform_2(%arg0: i32) -> (i32, i32) {
    %c0_i32 = arith.constant 0 : i32
    %c0_i32_0 = arith.constant 0 : i32
    return %arg0, %c0_i32 : i32, i32
  }
}

module attributes {stable_mosaic.version = 11 : i64} {
  func.func @_conv_bn_lrelu_kernel(%arg0: i32, %arg1: memref<104x128xbf16, #tpu.memory_space<vmem>>, %arg2: memref<128x128xbf16, #tpu.memory_space<vmem>>, %arg3: memref<1x4xf32, #tpu.memory_space<vmem>>, %arg4: memref<1x4xf32, #tpu.memory_space<vmem>>, %arg5: memref<104x4xf32, #tpu.memory_space<vmem>>) attributes {dimension_semantics = [#tpu.dimension_semantics<arbitrary>], iteration_bounds = array<i64: 1>, scalar_prefetch = 0 : i64, scratch_operands = 0 : i64, tpu.core_type = #tpu.core_type<tc>, window_params = [{transform_indices = @transform_0, window_bounds = array<i64: 104, 128>}, {pipeline_mode = #tpu.pipeline_mode<synchronous>, transform_indices = @transform_1, window_bounds = array<i64: 128, 128>}, {pipeline_mode = #tpu.pipeline_mode<synchronous>, transform_indices = @transform_2, window_bounds = array<i64: 1, 4>}, {pipeline_mode = #tpu.pipeline_mode<synchronous>, transform_indices = @transform_3, window_bounds = array<i64: 1, 4>}, {pipeline_mode = #tpu.pipeline_mode<synchronous>, transform_indices = @transform_4, window_bounds = array<i64: 104, 4>}]} {
    %c0 = arith.constant 0 : index
    %c0_0 = arith.constant 0 : index
    %0 = vector.load %arg1[%c0, %c0_0] : memref<104x128xbf16, #tpu.memory_space<vmem>>, vector<104x128xbf16>
    %c0_1 = arith.constant 0 : index
    %c0_2 = arith.constant 0 : index
    %1 = vector.load %arg2[%c0_1, %c0_2] : memref<128x128xbf16, #tpu.memory_space<vmem>>, vector<128x128xbf16>
    %cst = arith.constant dense<0.000000e+00> : vector<104x128xf32>
    %2 = tpu.matmul %0, %1, %cst {dimension_numbers = #tpu.dot_dimension_numbers<[1], [0], [0], [1], [0, 0, 1, 1], [], []>} : vector<104x128xbf16>, vector<128x128xbf16>, vector<104x128xf32> -> vector<104x128xf32>
    %c104_i32 = arith.constant 104 : i32
    %3 = arith.muli %arg0, %c104_i32 : i32
    %4 = tpu.assume_multiple %3, 8 : i32
    %5 = vector.extract_strided_slice %2 {offsets = [0, 0], sizes = [104, 4], strides = [1, 1]} : vector<104x128xf32> to vector<104x4xf32>
    %6 = arith.index_cast %4 : i32 to index
    %c0_3 = arith.constant 0 : index
    %7 = vector.load %arg5[%6, %c0_3] : memref<104x4xf32, #tpu.memory_space<vmem>>, vector<104x4xf32>
    tpu.vector_store %arg5[%6, %c0_3], %5 {strides = array<i32>} : memref<104x4xf32, #tpu.memory_space<vmem>>, vector<104x4xf32>,
    %c0_i32 = arith.constant 0 : i32
    %8 = arith.cmpi eq, %arg0, %c0_i32 : i32
    %9 = arith.extui %8 : i1 to i32
    %c0_i32_4 = arith.constant 0 : i32
    %10 = arith.cmpi ne, %9, %c0_i32_4 : i32
    scf.if %10 {
      %c0_5 = arith.constant 0 : index
      %c0_6 = arith.constant 0 : index
      %11 = vector.load %arg5[%c0_5, %c0_6] : memref<104x4xf32, #tpu.memory_space<vmem>>, vector<104x4xf32>
      %12 = tpu.iota {dimensions = array<i32: 0>} : vector<104x1xi32>
      %c98_i32 = arith.constant 98 : i32
      %13 = vector.broadcast %c98_i32 : i32 to vector<104x1xi32>
      %14 = arith.cmpi slt, %12, %13 : vector<104x1xi32>
      %15 = arith.extui %14 : vector<104x1xi1> to vector<104x1xi32>
      %16 = arith.sitofp %15 : vector<104x1xi32> to vector<104x1xf32>
      %17 = vector.broadcast %16 : vector<104x1xf32> to vector<104x4xf32>
      %18 = arith.mulf %11, %17 : vector<104x4xf32>
      %cst_7 = arith.constant dense<0.000000e+00> : vector<4xf32>
      %19 = vector.multi_reduction <add>, %18, %cst_7 [0] : vector<104x4xf32> to vector<4xf32>
      %20 = vector.shape_cast %19 : vector<4xf32> to vector<1x4xf32>
      %cst_8 = arith.constant 0.0102040814 : f32
      %21 = vector.broadcast %cst_8 : f32 to vector<1x4xf32>
      %22 = arith.mulf %20, %21 : vector<1x4xf32>
      %23 = vector.broadcast %22 : vector<1x4xf32> to vector<104x4xf32>
      %24 = arith.subf %11, %23 : vector<104x4xf32>
      %25 = vector.broadcast %16 : vector<104x1xf32> to vector<104x4xf32>
      %26 = arith.mulf %24, %25 : vector<104x4xf32>
      %27 = arith.mulf %26, %26 : vector<104x4xf32>
      %cst_9 = arith.constant dense<0.000000e+00> : vector<4xf32>
      %28 = vector.multi_reduction <add>, %27, %cst_9 [0] : vector<104x4xf32> to vector<4xf32>
      %29 = vector.shape_cast %28 : vector<4xf32> to vector<1x4xf32>
      %cst_10 = arith.constant 0.0102040814 : f32
      %30 = vector.broadcast %cst_10 : f32 to vector<1x4xf32>
      %31 = arith.mulf %29, %30 : vector<1x4xf32>
      %cst_11 = arith.constant 9.99999974E-6 : f32
      %32 = vector.broadcast %cst_11 : f32 to vector<1x4xf32>
      %33 = arith.addf %31, %32 : vector<1x4xf32>
      %34 = math.rsqrt %33 : vector<1x4xf32>
      %c0_12 = arith.constant 0 : index
      %c0_13 = arith.constant 0 : index
      %35 = vector.load %arg3[%c0_12, %c0_13] : memref<1x4xf32, #tpu.memory_space<vmem>>, vector<1x4xf32>
      %36 = arith.mulf %34, %35 : vector<1x4xf32>
      %c0_14 = arith.constant 0 : index
      %c0_15 = arith.constant 0 : index
      %37 = vector.load %arg4[%c0_14, %c0_15] : memref<1x4xf32, #tpu.memory_space<vmem>>, vector<1x4xf32>
      %38 = arith.mulf %22, %36 : vector<1x4xf32>
      %39 = arith.subf %37, %38 : vector<1x4xf32>
      %40 = vector.broadcast %36 : vector<1x4xf32> to vector<104x4xf32>
      %41 = arith.mulf %11, %40 : vector<104x4xf32>
      %42 = vector.broadcast %39 : vector<1x4xf32> to vector<104x4xf32>
      %43 = arith.addf %41, %42 : vector<104x4xf32>
      %cst_16 = arith.constant 0.000000e+00 : f32
      %44 = vector.broadcast %cst_16 : f32 to vector<104x4xf32>
      %45 = arith.cmpf oge, %43, %44 : vector<104x4xf32>
      %cst_17 = arith.constant 0.00999999977 : f32
      %46 = vector.broadcast %cst_17 : f32 to vector<104x4xf32>
      %47 = arith.mulf %46, %43 : vector<104x4xf32>
      %48 = arith.select %45, %43, %47 : vector<104x4xi1>, vector<104x4xf32>
      %c0_18 = arith.constant 0 : index
      %c0_19 = arith.constant 0 : index
      %49 = vector.load %arg5[%c0_18, %c0_19] : memref<104x4xf32, #tpu.memory_space<vmem>>, vector<104x4xf32>
      tpu.vector_store %arg5[%c0_18, %c0_19], %48 {strides = array<i32>} : memref<104x4xf32, #tpu.memory_space<vmem>>, vector<104x4xf32>,
    } else {
    }
    return
  }
  func.func @transform_0(%arg0: i32) -> (i32, i32) {
    %c0_i32 = arith.constant 0 : i32
    %c0_i32_0 = arith.constant 0 : i32
    return %arg0, %c0_i32 : i32, i32
  }
  func.func @transform_1(%arg0: i32) -> (i32, i32) {
    %c0_i32 = arith.constant 0 : i32
    %c0_i32_0 = arith.constant 0 : i32
    %c0_i32_1 = arith.constant 0 : i32
    return %c0_i32, %c0_i32_0 : i32, i32
  }
  func.func @transform_2(%arg0: i32) -> (i32, i32) {
    %c0_i32 = arith.constant 0 : i32
    %c0_i32_0 = arith.constant 0 : i32
    %c0_i32_1 = arith.constant 0 : i32
    return %c0_i32, %c0_i32_0 : i32, i32
  }
  func.func @transform_3(%arg0: i32) -> (i32, i32) {
    %c0_i32 = arith.constant 0 : i32
    %c0_i32_0 = arith.constant 0 : i32
    %c0_i32_1 = arith.constant 0 : i32
    return %c0_i32, %c0_i32_0 : i32, i32
  }
  func.func @transform_4(%arg0: i32) -> (i32, i32) {
    %c0_i32 = arith.constant 0 : i32
    %c0_i32_0 = arith.constant 0 : i32
    %c0_i32_1 = arith.constant 0 : i32
    return %c0_i32, %c0_i32_0 : i32, i32
  }
}

module attributes {stable_mosaic.version = 11 : i64} {
  func.func @_conv_bn_lrelu_kernel(%arg0: i32, %arg1: memref<8x128xbf16, #tpu.memory_space<vmem>>, %arg2: memref<128x128xbf16, #tpu.memory_space<vmem>>, %arg3: memref<1x8xf32, #tpu.memory_space<vmem>>, %arg4: memref<1x8xf32, #tpu.memory_space<vmem>>, %arg5: memref<1x8xf32, #tpu.memory_space<vmem>>, %arg6: memref<1x1xf32, #tpu.memory_space<vmem>>, %arg7: memref<8x1xf32, #tpu.memory_space<vmem>>, %arg8: memref<8x8xf32, #tpu.memory_space<vmem>>) attributes {dimension_semantics = [#tpu.dimension_semantics<arbitrary>], iteration_bounds = array<i64: 1>, scalar_prefetch = 0 : i64, scratch_operands = 1 : i64, tpu.core_type = #tpu.core_type<tc>, window_params = [{transform_indices = @transform_0, window_bounds = array<i64: 8, 128>}, {pipeline_mode = #tpu.pipeline_mode<synchronous>, transform_indices = @transform_1, window_bounds = array<i64: 128, 128>}, {pipeline_mode = #tpu.pipeline_mode<synchronous>, transform_indices = @transform_2, window_bounds = array<i64: 1, 8>}, {pipeline_mode = #tpu.pipeline_mode<synchronous>, transform_indices = @transform_3, window_bounds = array<i64: 1, 8>}, {pipeline_mode = #tpu.pipeline_mode<synchronous>, transform_indices = @transform_4, window_bounds = array<i64: 1, 8>}, {pipeline_mode = #tpu.pipeline_mode<synchronous>, transform_indices = @transform_5, window_bounds = array<i64: 1, 1>}, {pipeline_mode = #tpu.pipeline_mode<synchronous>, transform_indices = @transform_6, window_bounds = array<i64: 8, 1>}]} {
    %c0 = arith.constant 0 : index
    %c0_0 = arith.constant 0 : index
    %0 = vector.load %arg1[%c0, %c0_0] : memref<8x128xbf16, #tpu.memory_space<vmem>>, vector<8x128xbf16>
    %c0_1 = arith.constant 0 : index
    %c0_2 = arith.constant 0 : index
    %1 = vector.load %arg2[%c0_1, %c0_2] : memref<128x128xbf16, #tpu.memory_space<vmem>>, vector<128x128xbf16>
    %cst = arith.constant dense<0.000000e+00> : vector<8x128xf32>
    %2 = tpu.matmul %0, %1, %cst {dimension_numbers = #tpu.dot_dimension_numbers<[1], [0], [0], [1], [0, 0, 1, 1], [], []>} : vector<8x128xbf16>, vector<128x128xbf16>, vector<8x128xf32> -> vector<8x128xf32>
    %c8_i32 = arith.constant 8 : i32
    %3 = arith.muli %arg0, %c8_i32 : i32
    %4 = tpu.assume_multiple %3, 8 : i32
    %5 = vector.extract_strided_slice %2 {offsets = [0, 0], sizes = [8, 8], strides = [1, 1]} : vector<8x128xf32> to vector<8x8xf32>
    %6 = arith.index_cast %4 : i32 to index
    %c0_3 = arith.constant 0 : index
    %7 = vector.load %arg8[%6, %c0_3] : memref<8x8xf32, #tpu.memory_space<vmem>>, vector<8x8xf32>
    tpu.vector_store %arg8[%6, %c0_3], %5 {strides = array<i32>} : memref<8x8xf32, #tpu.memory_space<vmem>>, vector<8x8xf32>,
    %c0_i32 = arith.constant 0 : i32
    %8 = arith.cmpi eq, %arg0, %c0_i32 : i32
    %9 = arith.extui %8 : i1 to i32
    %c0_i32_4 = arith.constant 0 : i32
    %10 = arith.cmpi ne, %9, %c0_i32_4 : i32
    scf.if %10 {
      %c0_5 = arith.constant 0 : index
      %c0_6 = arith.constant 0 : index
      %11 = vector.load %arg8[%c0_5, %c0_6] : memref<8x8xf32, #tpu.memory_space<vmem>>, vector<8x8xf32>
      %12 = tpu.iota {dimensions = array<i32: 0>} : vector<8x1xi32>
      %c8_i32_7 = arith.constant 8 : i32
      %13 = vector.broadcast %c8_i32_7 : i32 to vector<8x1xi32>
      %14 = arith.cmpi slt, %12, %13 : vector<8x1xi32>
      %15 = arith.extui %14 : vector<8x1xi1> to vector<8x1xi32>
      %16 = arith.sitofp %15 : vector<8x1xi32> to vector<8x1xf32>
      %17 = vector.broadcast %16 : vector<8x1xf32> to vector<8x8xf32>
      %18 = arith.mulf %11, %17 : vector<8x8xf32>
      %cst_8 = arith.constant dense<0.000000e+00> : vector<8xf32>
      %19 = vector.multi_reduction <add>, %18, %cst_8 [0] : vector<8x8xf32> to vector<8xf32>
      %20 = vector.shape_cast %19 : vector<8xf32> to vector<1x8xf32>
      %cst_9 = arith.constant 1.250000e-01 : f32
      %21 = vector.broadcast %cst_9 : f32 to vector<1x8xf32>
      %22 = arith.mulf %20, %21 : vector<1x8xf32>
      %23 = vector.broadcast %22 : vector<1x8xf32> to vector<8x8xf32>
      %24 = arith.subf %11, %23 : vector<8x8xf32>
      %25 = vector.broadcast %16 : vector<8x1xf32> to vector<8x8xf32>
      %26 = arith.mulf %24, %25 : vector<8x8xf32>
      %27 = arith.mulf %26, %26 : vector<8x8xf32>
      %cst_10 = arith.constant dense<0.000000e+00> : vector<8xf32>
      %28 = vector.multi_reduction <add>, %27, %cst_10 [0] : vector<8x8xf32> to vector<8xf32>
      %29 = vector.shape_cast %28 : vector<8xf32> to vector<1x8xf32>
      %cst_11 = arith.constant 1.250000e-01 : f32
      %30 = vector.broadcast %cst_11 : f32 to vector<1x8xf32>
      %31 = arith.mulf %29, %30 : vector<1x8xf32>
      %cst_12 = arith.constant 9.99999974E-6 : f32
      %32 = vector.broadcast %cst_12 : f32 to vector<1x8xf32>
      %33 = arith.addf %31, %32 : vector<1x8xf32>
      %34 = math.rsqrt %33 : vector<1x8xf32>
      %c0_13 = arith.constant 0 : index
      %c0_14 = arith.constant 0 : index
      %35 = vector.load %arg3[%c0_13, %c0_14] : memref<1x8xf32, #tpu.memory_space<vmem>>, vector<1x8xf32>
      %36 = arith.mulf %34, %35 : vector<1x8xf32>
      %c0_15 = arith.constant 0 : index
      %c0_16 = arith.constant 0 : index
      %37 = vector.load %arg4[%c0_15, %c0_16] : memref<1x8xf32, #tpu.memory_space<vmem>>, vector<1x8xf32>
      %38 = arith.mulf %22, %36 : vector<1x8xf32>
      %39 = arith.subf %37, %38 : vector<1x8xf32>
      %40 = vector.broadcast %36 : vector<1x8xf32> to vector<8x8xf32>
      %41 = arith.mulf %11, %40 : vector<8x8xf32>
      %42 = vector.broadcast %39 : vector<1x8xf32> to vector<8x8xf32>
      %43 = arith.addf %41, %42 : vector<8x8xf32>
      %cst_17 = arith.constant 0.000000e+00 : f32
      %44 = vector.broadcast %cst_17 : f32 to vector<8x8xf32>
      %45 = arith.cmpf oge, %43, %44 : vector<8x8xf32>
      %cst_18 = arith.constant 0.00999999977 : f32
      %46 = vector.broadcast %cst_18 : f32 to vector<8x8xf32>
      %47 = arith.mulf %46, %43 : vector<8x8xf32>
      %48 = arith.select %45, %43, %47 : vector<8x8xi1>, vector<8x8xf32>
      %c0_19 = arith.constant 0 : index
      %c0_20 = arith.constant 0 : index
      %49 = vector.load %arg5[%c0_19, %c0_20] : memref<1x8xf32, #tpu.memory_space<vmem>>, vector<1x8xf32>
      %50 = vector.broadcast %49 : vector<1x8xf32> to vector<8x8xf32>
      %51 = arith.mulf %48, %50 : vector<8x8xf32>
      %cst_21 = arith.constant dense<0.000000e+00> : vector<8xf32>
      %52 = vector.multi_reduction <add>, %51, %cst_21 [1] : vector<8x8xf32> to vector<8xf32>
      %53 = vector.shape_cast %52 : vector<8xf32> to vector<8x1xf32>
      %c0_22 = arith.constant 0 : index
      %c0_23 = arith.constant 0 : index
      %54 = vector.load %arg6[%c0_22, %c0_23] : memref<1x1xf32, #tpu.memory_space<vmem>>, vector<1x1xf32>
      %55 = vector.broadcast %54 : vector<1x1xf32> to vector<8x1xf32>
      %56 = arith.addf %53, %55 : vector<8x1xf32>
      %cst_24 = arith.constant 0.000000e+00 : f32
      %57 = vector.broadcast %cst_24 : f32 to vector<8x1xf32>
      %58 = arith.subf %57, %56 : vector<8x1xf32>
      %59 = math.exp %58 : vector<8x1xf32>
      %cst_25 = arith.constant 1.000000e+00 : f32
      %60 = vector.broadcast %cst_25 : f32 to vector<8x1xf32>
      %61 = arith.addf %60, %59 : vector<8x1xf32>
      %cst_26 = arith.constant 1.000000e+00 : f32
      %62 = vector.broadcast %cst_26 : f32 to vector<8x1xf32>
      %63 = arith.divf %62, %61 : vector<8x1xf32>
      %c0_27 = arith.constant 0 : index
      %c0_28 = arith.constant 0 : index
      %64 = vector.load %arg7[%c0_27, %c0_28] : memref<8x1xf32, #tpu.memory_space<vmem>>, vector<8x1xf32>
      tpu.vector_store %arg7[%c0_27, %c0_28], %63 {strides = array<i32>} : memref<8x1xf32, #tpu.memory_space<vmem>>, vector<8x1xf32>,
    } else {
    }
    return
  }
  func.func @transform_0(%arg0: i32) -> (i32, i32) {
    %c0_i32 = arith.constant 0 : i32
    %c0_i32_0 = arith.constant 0 : i32
    return %arg0, %c0_i32 : i32, i32
  }
  func.func @transform_1(%arg0: i32) -> (i32, i32) {
    %c0_i32 = arith.constant 0 : i32
    %c0_i32_0 = arith.constant 0 : i32
    %c0_i32_1 = arith.constant 0 : i32
    return %c0_i32, %c0_i32_0 : i32, i32
  }
  func.func @transform_2(%arg0: i32) -> (i32, i32) {
    %c0_i32 = arith.constant 0 : i32
    %c0_i32_0 = arith.constant 0 : i32
    %c0_i32_1 = arith.constant 0 : i32
    return %c0_i32, %c0_i32_0 : i32, i32
  }
  func.func @transform_3(%arg0: i32) -> (i32, i32) {
    %c0_i32 = arith.constant 0 : i32
    %c0_i32_0 = arith.constant 0 : i32
    %c0_i32_1 = arith.constant 0 : i32
    return %c0_i32, %c0_i32_0 : i32, i32
  }
  func.func @transform_4(%arg0: i32) -> (i32, i32) {
    %c0_i32 = arith.constant 0 : i32
    %c0_i32_0 = arith.constant 0 : i32
    %c0_i32_1 = arith.constant 0 : i32
    return %c0_i32, %c0_i32_0 : i32, i32
  }
  func.func @transform_5(%arg0: i32) -> (i32, i32) {
    %c0_i32 = arith.constant 0 : i32
    %c0_i32_0 = arith.constant 0 : i32
    %c0_i32_1 = arith.constant 0 : i32
    return %c0_i32, %c0_i32_0 : i32, i32
  }
  func.func @transform_6(%arg0: i32) -> (i32, i32) {
    %c0_i32 = arith.constant 0 : i32
    %c0_i32_0 = arith.constant 0 : i32
    %c0_i32_1 = arith.constant 0 : i32
    return %c0_i32, %c0_i32_0 : i32, i32
  }
}

</mosaic_0001>

<llo_original>
// kernel: _lambda_.3
$region0: #{_lambda_.3}
  #allocation0 [shape = 'u32[]', space=smem, size = 0x4, offset = 0x4, fixed_abs, tag = 'smem constant byte address 0x4 - core index']
  #allocation1 [shape = 'u32[144,128]{1,0:T(1,128)}', space=vmem, size = 0x12000, scoped, tag = 'internal scratch']
  %s0 = inlined_call_operand.vmem [shape: bf16[512,256], index: 0, kind: input, shape index: {}]
  %s1 = inlined_call_operand.vmem [shape: bf16[256,128], index: 1, kind: input, shape index: {}]
  %s2 = inlined_call_operand.vmem [shape: f32[512,4], index: 2, kind: output, shape index: {}]
  %s3 = sld [smem:[#allocation0]]
  $region18: #{_lambda_.3} parent=0
    _
  %s5 = ssub.s32 1, %s3
  %s6 = scalar_select 0, %s5, %s3
  // Predicated region
  $region2: #{_lambda_.3} parent=0 // pred_check
    _
  $region3: #{_lambda_.3} parent=0 // pred_check_branch
    %8 = sbr.rel (0) target = $region5
  $region4: #{_lambda_.3} parent=0 // pred_region
    _
  $region5: #{_lambda_.3} parent=0 // pred_fallthru
    _
  // Predicated region
  $region6: #{_lambda_.3} parent=0 // pred_check
    _
  $region7: #{_lambda_.3} parent=0 // pred_check_branch
    %10 = sbr.rel (0) target = $region9
  $region8: #{_lambda_.3} parent=0 // pred_region
    _
  $region9: #{_lambda_.3} parent=0 // pred_fallthru
    _
  %v12 = vld [vmem:[%s0] sm:$0xff]
  %v13 = vld [vmem:[%s0 + $0x8] sm:$0xff]
  %v14 = vld [vmem:[%s0 + $0x10] sm:$0xff]
  %v15 = vld [vmem:[%s0 + $0x18] sm:$0xff]
  %v16 = vld [vmem:[%s0 + $0x20] sm:$0xff]
  %v17 = vld [vmem:[%s0 + $0x28] sm:$0xff]
  %v18 = vld [vmem:[%s0 + $0x30] sm:$0xff]
  %v19 = vld [vmem:[%s0 + $0x38] sm:$0xff]
  %v20 = vld [vmem:[%s0 + $0x40] sm:$0xff]
  %v21 = vld [vmem:[%s0 + $0x48] sm:$0xff]
  %v22 = vld [vmem:[%s0 + $0x50] sm:$0xff]
  %v23 = vld [vmem:[%s0 + $0x58] sm:$0xff]
  %v24 = vld [vmem:[%s0 + $0x60] sm:$0xff]
  %v25 = vld [vmem:[%s0 + $0x68] sm:$0xff]
  %v26 = vld [vmem:[%s0 + $0x70] sm:$0xff]
  %v27 = vld [vmem:[%s0 + $0x78] sm:$0xff]
  %v28 = vld [vmem:[%s0 + $0x80] sm:$0xff]
  %v29 = vld [vmem:[%s0 + $0x88] sm:$0xff]
  %v30 = vld [vmem:[%s0 + $0x90] sm:$0xff]
  %v31 = vld [vmem:[%s0 + $0x98] sm:$0xff]
  %v32 = vld [vmem:[%s0 + $0xa0] sm:$0xff]
  %v33 = vld [vmem:[%s0 + $0xa8] sm:$0xff]
  %v34 = vld [vmem:[%s0 + $0xb0] sm:$0xff]
  %v35 = vld [vmem:[%s0 + $0xb8] sm:$0xff]
  %v36 = vld [vmem:[%s0 + $0xc0] sm:$0xff]
  %v37 = vld [vmem:[%s0 + $0xc8] sm:$0xff]
  %v38 = vld [vmem:[%s0 + $0xd0] sm:$0xff]
  %v39 = vld [vmem:[%s0 + $0xd8] sm:$0xff]
  %v40 = vld [vmem:[%s0 + $0xe0] sm:$0xff]
  %v41 = vld [vmem:[%s0 + $0xe8] sm:$0xff]
  %v42 = vld [vmem:[%s0 + $0xf0] sm:$0xff]
  %v43 = vld [vmem:[%s0 + $0xf8] sm:$0xff]
  %v44 = vld [vmem:[%s0 + $0x100] sm:$0xff]
  %v45 = vld [vmem:[%s0 + $0x108] sm:$0xff]
  %v46 = vld [vmem:[%s0 + $0x110] sm:$0xff]
  %v47 = vld [vmem:[%s0 + $0x118] sm:$0xff]
  %v48 = vld [vmem:[%s0 + $0x120] sm:$0xff]
  %v49 = vld [vmem:[%s0 + $0x128] sm:$0xff]
  %v50 = vld [vmem:[%s0 + $0x130] sm:$0xff]
  %v51 = vld [vmem:[%s0 + $0x138] sm:$0xff]
  %v52 = vld [vmem:[%s0 + $0x140] sm:$0xff]
  %v53 = vld [vmem:[%s0 + $0x148] sm:$0xff]
  %v54 = vld [vmem:[%s0 + $0x150] sm:$0xff]
  %v55 = vld [vmem:[%s0 + $0x158] sm:$0xff]
  %v56 = vld [vmem:[%s0 + $0x160] sm:$0xff]
  %v57 = vld [vmem:[%s0 + $0x168] sm:$0xff]
  %v58 = vld [vmem:[%s0 + $0x170] sm:$0xff]
  %v59 = vld [vmem:[%s0 + $0x178] sm:$0xff]
  %v60 = vld [vmem:[%s0 + $0x180] sm:$0xff]
  %v61 = vld [vmem:[%s0 + $0x188] sm:$0xff]
  %v62 = vld [vmem:[%s0 + $0x190] sm:$0xff]
  %v63 = vld [vmem:[%s0 + $0x198] sm:$0xff]
  %v64 = vld [vmem:[%s0 + $0x1a0] sm:$0xff]
  %v65 = vld [vmem:[%s0 + $0x1a8] sm:$0xff]
  %v66 = vld [vmem:[%s0 + $0x1b0] sm:$0xff]
  %v67 = vld [vmem:[%s0 + $0x1b8] sm:$0xff]
  %v68 = vld [vmem:[%s0 + $0x1c0] sm:$0xff]
  %v69 = vld [vmem:[%s0 + $0x1c8] sm:$0xff]
  %v70 = vld [vmem:[%s0 + $0x1d0] sm:$0xff]
  %v71 = vld [vmem:[%s0 + $0x1d8] sm:$0xff]
  %v72 = vld [vmem:[%s0 + $0x1e0] sm:$0xff]
  %v73 = vld [vmem:[%s0 + $0x1e8] sm:$0xff]
  %v74 = vld [vmem:[%s0 + $0x1f0] sm:$0xff]
  %v75 = vld [vmem:[%s0 + $0x1f8] sm:$0xff]
  %v76 = vld [vmem:[%s1] sm:$0xf]
  %v77 = vld [vmem:[%s1 + $0x4] sm:$0xf]
  %v78 = vld [vmem:[%s1 + $0x8] sm:$0xf]
  %v79 = vld [vmem:[%s1 + $0xc] sm:$0xf]
  %v80 = vld [vmem:[%s1 + $0x10] sm:$0xf]
  %v81 = vld [vmem:[%s1 + $0x14] sm:$0xf]
  %v82 = vld [vmem:[%s1 + $0x18] sm:$0xf]
  %v83 = vld [vmem:[%s1 + $0x1c] sm:$0xf]
  %v84 = vld [vmem:[%s1 + $0x20] sm:$0xf]
  %v85 = vld [vmem:[%s1 + $0x24] sm:$0xf]
  %v86 = vld [vmem:[%s1 + $0x28] sm:$0xf]
  %v87 = vld [vmem:[%s1 + $0x2c] sm:$0xf]
  %v88 = vld [vmem:[%s1 + $0x30] sm:$0xf]
  %v89 = vld [vmem:[%s1 + $0x34] sm:$0xf]
  %v90 = vld [vmem:[%s1 + $0x38] sm:$0xf]
  %v91 = vld [vmem:[%s1 + $0x3c] sm:$0xf]
  %v92 = vld [vmem:[%s1 + $0x40] sm:$0xf]
  %v93 = vld [vmem:[%s1 + $0x44] sm:$0xf]
  %v94 = vld [vmem:[%s1 + $0x48] sm:$0xf]
  %v95 = vld [vmem:[%s1 + $0x4c] sm:$0xf]
  %v96 = vld [vmem:[%s1 + $0x50] sm:$0xf]
  %v97 = vld [vmem:[%s1 + $0x54] sm:$0xf]
  %v98 = vld [vmem:[%s1 + $0x58] sm:$0xf]
  %v99 = vld [vmem:[%s1 + $0x5c] sm:$0xf]
  %v100 = vld [vmem:[%s1 + $0x60] sm:$0xf]
  %v101 = vld [vmem:[%s1 + $0x64] sm:$0xf]
  %v102 = vld [vmem:[%s1 + $0x68] sm:$0xf]
  %v103 = vld [vmem:[%s1 + $0x6c] sm:$0xf]
  %v104 = vld [vmem:[%s1 + $0x70] sm:$0xf]
  %v105 = vld [vmem:[%s1 + $0x74] sm:$0xf]
  %v106 = vld [vmem:[%s1 + $0x78] sm:$0xf]
  %v107 = vld [vmem:[%s1 + $0x7c] sm:$0xf]
  %v172 = vunpack.c.l.b16 %v12
  %v173 = vunpack.c.h.b16 %v12
  %v174 = vunpack.c.l.b16 %v13
  %v175 = vunpack.c.h.b16 %v13
  %v176 = vunpack.c.l.b16 %v14
  %v177 = vunpack.c.h.b16 %v14
  %v178 = vunpack.c.l.b16 %v15
  %v179 = vunpack.c.h.b16 %v15
  %v180 = vunpack.c.l.b16 %v16
  %v181 = vunpack.c.h.b16 %v16
  %v182 = vunpack.c.l.b16 %v17
  %v183 = vunpack.c.h.b16 %v17
  %v184 = vunpack.c.l.b16 %v18
  %v185 = vunpack.c.h.b16 %v18
  %v186 = vunpack.c.l.b16 %v19
  %v187 = vunpack.c.h.b16 %v19
  %v188 = vunpack.c.l.b16 %v20
  %v189 = vunpack.c.h.b16 %v20
  %v190 = vunpack.c.l.b16 %v21
  %v191 = vunpack.c.h.b16 %v21
  %v192 = vunpack.c.l.b16 %v22
  %v193 = vunpack.c.h.b16 %v22
  %v194 = vunpack.c.l.b16 %v23
  %v195 = vunpack.c.h.b16 %v23
  %v196 = vunpack.c.l.b16 %v24
  %v197 = vunpack.c.h.b16 %v24
  %v198 = vunpack.c.l.b16 %v25
  %v199 = vunpack.c.h.b16 %v25
  %v200 = vunpack.c.l.b16 %v26
  %v201 = vunpack.c.h.b16 %v26
  %v202 = vunpack.c.l.b16 %v27
  %v203 = vunpack.c.h.b16 %v27
  %v204 = vunpack.c.l.b16 %v28
  %v205 = vunpack.c.h.b16 %v28
  %v206 = vunpack.c.l.b16 %v29
  %v207 = vunpack.c.h.b16 %v29
  %v208 = vunpack.c.l.b16 %v30
  %v209 = vunpack.c.h.b16 %v30
  %v210 = vunpack.c.l.b16 %v31
  %v211 = vunpack.c.h.b16 %v31
  %v212 = vunpack.c.l.b16 %v32
  %v213 = vunpack.c.h.b16 %v32
  %v214 = vunpack.c.l.b16 %v33
  %v215 = vunpack.c.h.b16 %v33
  %v216 = vunpack.c.l.b16 %v34
  %v217 = vunpack.c.h.b16 %v34
  %v218 = vunpack.c.l.b16 %v35
  %v219 = vunpack.c.h.b16 %v35
  %v220 = vunpack.c.l.b16 %v36
  %v221 = vunpack.c.h.b16 %v36
  %v222 = vunpack.c.l.b16 %v37
  %v223 = vunpack.c.h.b16 %v37
  %v224 = vunpack.c.l.b16 %v38
  %v225 = vunpack.c.h.b16 %v38
  %v226 = vunpack.c.l.b16 %v39
  %v227 = vunpack.c.h.b16 %v39
  %v228 = vunpack.c.l.b16 %v40
  %v229 = vunpack.c.h.b16 %v40
  %v230 = vunpack.c.l.b16 %v41
  %v231 = vunpack.c.h.b16 %v41
  %v232 = vunpack.c.l.b16 %v42
  %v233 = vunpack.c.h.b16 %v42
  %v234 = vunpack.c.l.b16 %v43
  %v235 = vunpack.c.h.b16 %v43
  %v236 = vunpack.c.l.b16 %v44
  %v237 = vunpack.c.h.b16 %v44
  %v238 = vunpack.c.l.b16 %v45
  %v239 = vunpack.c.h.b16 %v45
  %v240 = vunpack.c.l.b16 %v46
  %v241 = vunpack.c.h.b16 %v46
  %v242 = vunpack.c.l.b16 %v47
  %v243 = vunpack.c.h.b16 %v47
  %v244 = vunpack.c.l.b16 %v48
  %v245 = vunpack.c.h.b16 %v48
  %v246 = vunpack.c.l.b16 %v49
  %v247 = vunpack.c.h.b16 %v49
  %v248 = vunpack.c.l.b16 %v50
  %v249 = vunpack.c.h.b16 %v50
  %v250 = vunpack.c.l.b16 %v51
  %v251 = vunpack.c.h.b16 %v51
  %v252 = vunpack.c.l.b16 %v52
  %v253 = vunpack.c.h.b16 %v52
  %v254 = vunpack.c.l.b16 %v53
  %v255 = vunpack.c.h.b16 %v53
  %v256 = vunpack.c.l.b16 %v54
  %v257 = vunpack.c.h.b16 %v54
  %v258 = vunpack.c.l.b16 %v55
  %v259 = vunpack.c.h.b16 %v55
  %v260 = vunpack.c.l.b16 %v56
  %v261 = vunpack.c.h.b16 %v56
  %v262 = vunpack.c.l.b16 %v57
  %v263 = vunpack.c.h.b16 %v57
  %v264 = vunpack.c.l.b16 %v58
  %v265 = vunpack.c.h.b16 %v58
  %v266 = vunpack.c.l.b16 %v59
  %v267 = vunpack.c.h.b16 %v59
  %v268 = vunpack.c.l.b16 %v60
  %v269 = vunpack.c.h.b16 %v60
  %v270 = vunpack.c.l.b16 %v61
  %v271 = vunpack.c.h.b16 %v61
  %v272 = vunpack.c.l.b16 %v62
  %v273 = vunpack.c.h.b16 %v62
  %v274 = vunpack.c.l.b16 %v63
  %v275 = vunpack.c.h.b16 %v63
  %v276 = vunpack.c.l.b16 %v64
  %v277 = vunpack.c.h.b16 %v64
  %v278 = vunpack.c.l.b16 %v65
  %v279 = vunpack.c.h.b16 %v65
  %v280 = vunpack.c.l.b16 %v66
  %v281 = vunpack.c.h.b16 %v66
  %v282 = vunpack.c.l.b16 %v67
  %v283 = vunpack.c.h.b16 %v67
  %v284 = vunpack.c.l.b16 %v68
  %v285 = vunpack.c.h.b16 %v68
  %v286 = vunpack.c.l.b16 %v69
  %v287 = vunpack.c.h.b16 %v69
  %v288 = vunpack.c.l.b16 %v70
  %v289 = vunpack.c.h.b16 %v70
  %v290 = vunpack.c.l.b16 %v71
  %v291 = vunpack.c.h.b16 %v71
  %v292 = vunpack.c.l.b16 %v72
  %v293 = vunpack.c.h.b16 %v72
  %v294 = vunpack.c.l.b16 %v73
  %v295 = vunpack.c.h.b16 %v73
  %v296 = vunpack.c.l.b16 %v74
  %v297 = vunpack.c.h.b16 %v74
  %v298 = vunpack.c.l.b16 %v75
  %v299 = vunpack.c.h.b16 %v75
  %v300 = vpack.c.b16 %v174, %v172
  %v301 = vpack.c.b16 %v175, %v173
  %v302 = vpack.c.b16 %v178, %v176
  %v303 = vpack.c.b16 %v179, %v177
  %v304 = vpack.c.b16 %v182, %v180
  %v305 = vpack.c.b16 %v183, %v181
  %v306 = vpack.c.b16 %v186, %v184
  %v307 = vpack.c.b16 %v187, %v185
  %v308 = vpack.c.b16 %v190, %v188
  %v309 = vpack.c.b16 %v191, %v189
  %v310 = vpack.c.b16 %v194, %v192
  %v311 = vpack.c.b16 %v195, %v193
  %v312 = vpack.c.b16 %v198, %v196
  %v313 = vpack.c.b16 %v199, %v197
  %v314 = vpack.c.b16 %v202, %v200
  %v315 = vpack.c.b16 %v203, %v201
  %v316 = vpack.c.b16 %v206, %v204
  %v317 = vpack.c.b16 %v207, %v205
  %v318 = vpack.c.b16 %v210, %v208
  %v319 = vpack.c.b16 %v211, %v209
  %v320 = vpack.c.b16 %v214, %v212
  %v321 = vpack.c.b16 %v215, %v213
  %v322 = vpack.c.b16 %v218, %v216
  %v323 = vpack.c.b16 %v219, %v217
  %v324 = vpack.c.b16 %v222, %v220
  %v325 = vpack.c.b16 %v223, %v221
  %v326 = vpack.c.b16 %v226, %v224
  %v327 = vpack.c.b16 %v227, %v225
  %v328 = vpack.c.b16 %v230, %v228
  %v329 = vpack.c.b16 %v231, %v229
  %v330 = vpack.c.b16 %v234, %v232
  %v331 = vpack.c.b16 %v235, %v233
  %v332 = vpack.c.b16 %v238, %v236
  %v333 = vpack.c.b16 %v239, %v237
  %v334 = vpack.c.b16 %v242, %v240
  %v335 = vpack.c.b16 %v243, %v241
  %v336 = vpack.c.b16 %v246, %v244
  %v337 = vpack.c.b16 %v247, %v245
  %v338 = vpack.c.b16 %v250, %v248
  %v339 = vpack.c.b16 %v251, %v249
  %v340 = vpack.c.b16 %v254, %v252
  %v341 = vpack.c.b16 %v255, %v253
  %v342 = vpack.c.b16 %v258, %v256
  %v343 = vpack.c.b16 %v259, %v257
  %v344 = vpack.c.b16 %v262, %v260
  %v345 = vpack.c.b16 %v263, %v261
  %v346 = vpack.c.b16 %v266, %v264
  %v347 = vpack.c.b16 %v267, %v265
  %v348 = vpack.c.b16 %v270, %v268
  %v349 = vpack.c.b16 %v271, %v269
  %v350 = vpack.c.b16 %v274, %v272
  %v351 = vpack.c.b16 %v275, %v273
  %v352 = vpack.c.b16 %v278, %v276
  %v353 = vpack.c.b16 %v279, %v277
  %v354 = vpack.c.b16 %v282, %v280
  %v355 = vpack.c.b16 %v283, %v281
  %v356 = vpack.c.b16 %v286, %v284
  %v357 = vpack.c.b16 %v287, %v285
  %v358 = vpack.c.b16 %v290, %v288
  %v359 = vpack.c.b16 %v291, %v289
  %v360 = vpack.c.b16 %v294, %v292
  %v361 = vpack.c.b16 %v295, %v293
  %v362 = vpack.c.b16 %v298, %v296
  %v363 = vpack.c.b16 %v299, %v297
  %v460 = vunpack.c.l.b16 %v76
  %v461 = vunpack.c.l.b16 %v77
  %v462 = vunpack.c.l.b16 %v78
  %v463 = vunpack.c.l.b16 %v79
  %v464 = vunpack.c.l.b16 %v80
  %v465 = vunpack.c.l.b16 %v81
  %v466 = vunpack.c.l.b16 %v82
  %v467 = vunpack.c.l.b16 %v83
  %v468 = vunpack.c.l.b16 %v84
  %v469 = vunpack.c.l.b16 %v85
  %v470 = vunpack.c.l.b16 %v86
  %v471 = vunpack.c.l.b16 %v87
  %v472 = vunpack.c.l.b16 %v88
  %v473 = vunpack.c.l.b16 %v89
  %v474 = vunpack.c.l.b16 %v90
  %v475 = vunpack.c.l.b16 %v91
  %v476 = vunpack.c.l.b16 %v92
  %v477 = vunpack.c.l.b16 %v93
  %v478 = vunpack.c.l.b16 %v94
  %v479 = vunpack.c.l.b16 %v95
  %v480 = vunpack.c.l.b16 %v96
  %v481 = vunpack.c.l.b16 %v97
  %v482 = vunpack.c.l.b16 %v98
  %v483 = vunpack.c.l.b16 %v99
  %v484 = vunpack.c.l.b16 %v100
  %v485 = vunpack.c.l.b16 %v101
  %v486 = vunpack.c.l.b16 %v102
  %v487 = vunpack.c.l.b16 %v103
  %v488 = vunpack.c.l.b16 %v104
  %v489 = vunpack.c.l.b16 %v105
  %v490 = vunpack.c.l.b16 %v106
  %v491 = vunpack.c.l.b16 %v107
  %v492 = vpack.c.b16 %v461, %v460
  %v493 = vpack.c.b16 %v463, %v462
  %v494 = vpack.c.b16 %v465, %v464
  %v495 = vpack.c.b16 %v467, %v466
  %v496 = vpack.c.b16 %v469, %v468
  %v497 = vpack.c.b16 %v471, %v470
  %v498 = vpack.c.b16 %v473, %v472
  %v499 = vpack.c.b16 %v475, %v474
  %v500 = vpack.c.b16 %v477, %v476
  %v501 = vpack.c.b16 %v479, %v478
  %v502 = vpack.c.b16 %v481, %v480
  %v503 = vpack.c.b16 %v483, %v482
  %v504 = vpack.c.b16 %v485, %v484
  %v505 = vpack.c.b16 %v487, %v486
  %v506 = vpack.c.b16 %v489, %v488
  %v507 = vpack.c.b16 %v491, %v490
  %524 = vmatprep.subr.bf16.mxu0 0
  %525 = vmatpush1.bf16.msra.mxu0 %v499
  %526 = vmatprep.subr.bf16.mxu0 0
  %527 = vmatpush1.bf16.msra.mxu0 %v498
  %528 = vmatprep.subr.bf16.mxu0 0
  %529 = vmatpush1.bf16.msra.mxu0 %v497
  %530 = vmatprep.subr.bf16.mxu0 0
  %531 = vmatpush1.bf16.msra.mxu0 %v496
  %532 = vmatprep.subr.bf16.mxu0 0
  %533 = vmatpush1.bf16.msra.mxu0 %v495
  %534 = vmatprep.subr.bf16.mxu0 0
  %535 = vmatpush1.bf16.msra.mxu0 %v494
  %536 = vmatprep.subr.bf16.mxu0 0
  %537 = vmatpush1.bf16.msra.mxu0 %v493
  %538 = vmatprep.subr.bf16.mxu0 0
  %539 = vmatpush1.bf16.msra.mxu0 %v492
  %540 = vmatprep.subr.bf16.mxu0 0
  %541 = vmatpush2.bf16.msra.mxu0 %v507
  %542 = vmatprep.subr.bf16.mxu0 0
  %543 = vmatpush2.bf16.msra.mxu0 %v506
  %544 = vmatprep.subr.bf16.mxu0 0
  %545 = vmatpush2.bf16.msra.mxu0 %v505
  %546 = vmatprep.subr.bf16.mxu0 0
  %547 = vmatpush2.bf16.msra.mxu0 %v504
  %548 = vmatprep.subr.bf16.mxu0 0
  %549 = vmatpush2.bf16.msra.mxu0 %v503
  %550 = vmatprep.subr.bf16.mxu0 0
  %551 = vmatpush2.bf16.msra.mxu0 %v502
  %552 = vmatprep.subr.bf16.mxu0 0
  %553 = vmatpush2.bf16.msra.mxu0 %v501
  %554 = vmatprep.subr.bf16.mxu0 0
  %555 = vmatpush2.bf16.msra.mxu0 %v500
  %556 = vmatprep.mubr.bf16.mxu0 %v301
  %557 = vmatmul.mubr.bf16.gmra.mxu0 %v300
  %v558 = vpop.f32.mrf.mxu0
  %v559 = vadd.f32 0.0, %v558
  %v560 = vpop.f32.mrf.mxu0
  %v561 = vpop.f32.mrf.mxu0
  %v562 = vadd.f32 0.0, %v561
  %v563 = vpop.f32.mrf.mxu0
  %564 = vmatprep.mubr.bf16.mxu0 %v303
  %565 = vmatmul.mubr.bf16.gmra.mxu0 %v302
  %v566 = vpop.f32.mrf.mxu0
  %v567 = vadd.f32 0.0, %v566
  %v568 = vpop.f32.mrf.mxu0
  %v569 = vpop.f32.mrf.mxu0
  %v570 = vadd.f32 0.0, %v569
  %v571 = vpop.f32.mrf.mxu0
  %572 = vmatprep.mubr.bf16.mxu0 %v305
  %573 = vmatmul.mubr.bf16.gmra.mxu0 %v304
  %v574 = vpop.f32.mrf.mxu0
  %v575 = vadd.f32 0.0, %v574
  %v576 = vpop.f32.mrf.mxu0
  %v577 = vpop.f32.mrf.mxu0
  %v578 = vadd.f32 0.0, %v577
  %v579 = vpop.f32.mrf.mxu0
  %580 = vmatprep.mubr.bf16.mxu0 %v307
  %581 = vmatmul.mubr.bf16.gmra.mxu0 %v306
  %v582 = vpop.f32.mrf.mxu0
  %v583 = vadd.f32 0.0, %v582
  %v584 = vpop.f32.mrf.mxu0
  %v585 = vpop.f32.mrf.mxu0
  %v586 = vadd.f32 0.0, %v585
  %v587 = vpop.f32.mrf.mxu0
  %588 = vmatprep.mubr.bf16.mxu0 %v309
  %589 = vmatmul.mubr.bf16.gmra.mxu0 %v308
  %v590 = vpop.f32.mrf.mxu0
  %v591 = vadd.f32 0.0, %v590
  %v592 = vpop.f32.mrf.mxu0
  %v593 = vpop.f32.mrf.mxu0
  %v594 = vadd.f32 0.0, %v593
  %v595 = vpop.f32.mrf.mxu0
  %596 = vmatprep.mubr.bf16.mxu0 %v311
  %597 = vmatmul.mubr.bf16.gmra.mxu0 %v310
  %v598 = vpop.f32.mrf.mxu0
  %v599 = vadd.f32 0.0, %v598
  %v600 = vpop.f32.mrf.mxu0
  %v601 = vpop.f32.mrf.mxu0
  %v602 = vadd.f32 0.0, %v601
  %v603 = vpop.f32.mrf.mxu0
  %604 = vmatprep.mubr.bf16.mxu0 %v313
  %605 = vmatmul.mubr.bf16.gmra.mxu0 %v312
  %v606 = vpop.f32.mrf.mxu0
  %v607 = vadd.f32 0.0, %v606
  %v608 = vpop.f32.mrf.mxu0
  %v609 = vpop.f32.mrf.mxu0
  %v610 = vadd.f32 0.0, %v609
  %v611 = vpop.f32.mrf.mxu0
  %612 = vmatprep.mubr.bf16.mxu0 %v315
  %613 = vmatmul.mubr.bf16.gmra.mxu0 %v314
  %v614 = vpop.f32.mrf.mxu0
  %v615 = vadd.f32 0.0, %v614
  %v616 = vpop.f32.mrf.mxu0
  %v617 = vpop.f32.mrf.mxu0
  %v618 = vadd.f32 0.0, %v617
  %v619 = vpop.f32.mrf.mxu0
  %620 = vmatprep.mubr.bf16.mxu0 %v317
  %621 = vmatmul.mubr.bf16.gmra.mxu0 %v316
  %v622 = vpop.f32.mrf.mxu0
  %v623 = vadd.f32 0.0, %v622
  %v624 = vpop.f32.mrf.mxu0
  %v625 = vpop.f32.mrf.mxu0
  %v626 = vadd.f32 0.0, %v625
  %v627 = vpop.f32.mrf.mxu0
  %628 = vmatprep.mubr.bf16.mxu0 %v319
  %629 = vmatmul.mubr.bf16.gmra.mxu0 %v318
  %v630 = vpop.f32.mrf.mxu0
  %v631 = vadd.f32 0.0, %v630
  %v632 = vpop.f32.mrf.mxu0
  %v633 = vpop.f32.mrf.mxu0
  %v634 = vadd.f32 0.0, %v633
  %v635 = vpop.f32.mrf.mxu0
  %636 = vmatprep.mubr.bf16.mxu0 %v321
  %637 = vmatmul.mubr.bf16.gmra.mxu0 %v320
  %v638 = vpop.f32.mrf.mxu0
  %v639 = vadd.f32 0.0, %v638
  %v640 = vpop.f32.mrf.mxu0
  %v641 = vpop.f32.mrf.mxu0
  %v642 = vadd.f32 0.0, %v641
  %v643 = vpop.f32.mrf.mxu0
  %644 = vmatprep.mubr.bf16.mxu0 %v323
  %645 = vmatmul.mubr.bf16.gmra.mxu0 %v322
  %v646 = vpop.f32.mrf.mxu0
  %v647 = vadd.f32 0.0, %v646
  %v648 = vpop.f32.mrf.mxu0
  %v649 = vpop.f32.mrf.mxu0
  %v650 = vadd.f32 0.0, %v649
  %v651 = vpop.f32.mrf.mxu0
  %652 = vmatprep.mubr.bf16.mxu0 %v325
  %653 = vmatmul.mubr.bf16.gmra.mxu0 %v324
  %v654 = vpop.f32.mrf.mxu0
  %v655 = vadd.f32 0.0, %v654
  %v656 = vpop.f32.mrf.mxu0
  %v657 = vpop.f32.mrf.mxu0
  %v658 = vadd.f32 0.0, %v657
  %v659 = vpop.f32.mrf.mxu0
  %660 = vmatprep.mubr.bf16.mxu0 %v327
  %661 = vmatmul.mubr.bf16.gmra.mxu0 %v326
  %v662 = vpop.f32.mrf.mxu0
  %v663 = vadd.f32 0.0, %v662
  %v664 = vpop.f32.mrf.mxu0
  %v665 = vpop.f32.mrf.mxu0
  %v666 = vadd.f32 0.0, %v665
  %v667 = vpop.f32.mrf.mxu0
  %668 = vmatprep.mubr.bf16.mxu0 %v329
  %669 = vmatmul.mubr.bf16.gmra.mxu0 %v328
  %v670 = vpop.f32.mrf.mxu0
  %v671 = vadd.f32 0.0, %v670
  %v672 = vpop.f32.mrf.mxu0
  %v673 = vpop.f32.mrf.mxu0
  %v674 = vadd.f32 0.0, %v673
  %v675 = vpop.f32.mrf.mxu0
  %676 = vmatprep.mubr.bf16.mxu0 %v331
  %677 = vmatmul.mubr.bf16.gmra.mxu0 %v330
  %v678 = vpop.f32.mrf.mxu0
  %v679 = vadd.f32 0.0, %v678
  %v680 = vpop.f32.mrf.mxu0
  %v681 = vpop.f32.mrf.mxu0
  %v682 = vadd.f32 0.0, %v681
  %v683 = vpop.f32.mrf.mxu0
  %684 = vmatprep.mubr.bf16.mxu0 %v333
  %685 = vmatmul.mubr.bf16.gmra.mxu0 %v332
  %v686 = vpop.f32.mrf.mxu0
  %v687 = vadd.f32 0.0, %v686
  %v688 = vpop.f32.mrf.mxu0
  %v689 = vpop.f32.mrf.mxu0
  %v690 = vadd.f32 0.0, %v689
  %v691 = vpop.f32.mrf.mxu0
  %692 = vmatprep.mubr.bf16.mxu0 %v335
  %693 = vmatmul.mubr.bf16.gmra.mxu0 %v334
  %v694 = vpop.f32.mrf.mxu0
  %v695 = vadd.f32 0.0, %v694
  %v696 = vpop.f32.mrf.mxu0
  %v697 = vpop.f32.mrf.mxu0
  %v698 = vadd.f32 0.0, %v697
  %v699 = vpop.f32.mrf.mxu0
  %700 = vmatprep.mubr.bf16.mxu0 %v337
  %701 = vmatmul.mubr.bf16.gmra.mxu0 %v336
  %v702 = vpop.f32.mrf.mxu0
  %v703 = vadd.f32 0.0, %v702
  %v704 = vpop.f32.mrf.mxu0
  %v705 = vpop.f32.mrf.mxu0
  %v706 = vadd.f32 0.0, %v705
  %v707 = vpop.f32.mrf.mxu0
  %708 = vmatprep.mubr.bf16.mxu0 %v339
  %709 = vmatmul.mubr.bf16.gmra.mxu0 %v338
  %v710 = vpop.f32.mrf.mxu0
  %v711 = vadd.f32 0.0, %v710
  %v712 = vpop.f32.mrf.mxu0
  %v713 = vpop.f32.mrf.mxu0
  %v714 = vadd.f32 0.0, %v713
  %v715 = vpop.f32.mrf.mxu0
  %716 = vmatprep.mubr.bf16.mxu0 %v341
  %717 = vmatmul.mubr.bf16.gmra.mxu0 %v340
  %v718 = vpop.f32.mrf.mxu0
  %v719 = vadd.f32 0.0, %v718
  %v720 = vpop.f32.mrf.mxu0
  %v721 = vpop.f32.mrf.mxu0
  %v722 = vadd.f32 0.0, %v721
  %v723 = vpop.f32.mrf.mxu0
  %724 = vmatprep.mubr.bf16.mxu0 %v343
  %725 = vmatmul.mubr.bf16.gmra.mxu0 %v342
  %v726 = vpop.f32.mrf.mxu0
  %v727 = vadd.f32 0.0, %v726
  %v728 = vpop.f32.mrf.mxu0
  %v729 = vpop.f32.mrf.mxu0
  %v730 = vadd.f32 0.0, %v729
  %v731 = vpop.f32.mrf.mxu0
  %732 = vmatprep.mubr.bf16.mxu0 %v345
  %733 = vmatmul.mubr.bf16.gmra.mxu0 %v344
  %v734 = vpop.f32.mrf.mxu0
  %v735 = vadd.f32 0.0, %v734
  %v736 = vpop.f32.mrf.mxu0
  %v737 = vpop.f32.mrf.mxu0
  %v738 = vadd.f32 0.0, %v737
  %v739 = vpop.f32.mrf.mxu0
  %740 = vmatprep.mubr.bf16.mxu0 %v347
  %741 = vmatmul.mubr.bf16.gmra.mxu0 %v346
  %v742 = vpop.f32.mrf.mxu0
  %v743 = vadd.f32 0.0, %v742
  %v744 = vpop.f32.mrf.mxu0
  %v745 = vpop.f32.mrf.mxu0
  %v746 = vadd.f32 0.0, %v745
  %v747 = vpop.f32.mrf.mxu0
  %748 = vmatprep.mubr.bf16.mxu0 %v349
  %749 = vmatmul.mubr.bf16.gmra.mxu0 %v348
  %v750 = vpop.f32.mrf.mxu0
  %v751 = vadd.f32 0.0, %v750
  %v752 = vpop.f32.mrf.mxu0
  %v753 = vpop.f32.mrf.mxu0
  %v754 = vadd.f32 0.0, %v753
  %v755 = vpop.f32.mrf.mxu0
  %756 = vmatprep.mubr.bf16.mxu0 %v351
  %757 = vmatmul.mubr.bf16.gmra.mxu0 %v350
  %v758 = vpop.f32.mrf.mxu0
  %v759 = vadd.f32 0.0, %v758
  %v760 = vpop.f32.mrf.mxu0
  %v761 = vpop.f32.mrf.mxu0
  %v762 = vadd.f32 0.0, %v761
  %v763 = vpop.f32.mrf.mxu0
  %764 = vmatprep.mubr.bf16.mxu0 %v353
  %765 = vmatmul.mubr.bf16.gmra.mxu0 %v352
  %v766 = vpop.f32.mrf.mxu0
  %v767 = vadd.f32 0.0, %v766
  %v768 = vpop.f32.mrf.mxu0
  %v769 = vpop.f32.mrf.mxu0
  %v770 = vadd.f32 0.0, %v769
  %v771 = vpop.f32.mrf.mxu0
  %772 = vmatprep.mubr.bf16.mxu0 %v355
  %773 = vmatmul.mubr.bf16.gmra.mxu0 %v354
  %v774 = vpop.f32.mrf.mxu0
  %v775 = vadd.f32 0.0, %v774
  %v776 = vpop.f32.mrf.mxu0
  %v777 = vpop.f32.mrf.mxu0
  %v778 = vadd.f32 0.0, %v777
  %v779 = vpop.f32.mrf.mxu0
  %780 = vmatprep.mubr.bf16.mxu0 %v357
  %781 = vmatmul.mubr.bf16.gmra.mxu0 %v356
  %v782 = vpop.f32.mrf.mxu0
  %v783 = vadd.f32 0.0, %v782
  %v784 = vpop.f32.mrf.mxu0
  %v785 = vpop.f32.mrf.mxu0
  %v786 = vadd.f32 0.0, %v785
  %v787 = vpop.f32.mrf.mxu0
  %788 = vmatprep.mubr.bf16.mxu0 %v359
  %789 = vmatmul.mubr.bf16.gmra.mxu0 %v358
  %v790 = vpop.f32.mrf.mxu0
  %v791 = vadd.f32 0.0, %v790
  %v792 = vpop.f32.mrf.mxu0
  %v793 = vpop.f32.mrf.mxu0
  %v794 = vadd.f32 0.0, %v793
  %v795 = vpop.f32.mrf.mxu0
  %796 = vmatprep.mubr.bf16.mxu0 %v361
  %797 = vmatmul.mubr.bf16.gmra.mxu0 %v360
  %v798 = vpop.f32.mrf.mxu0
  %v799 = vadd.f32 0.0, %v798
  %v800 = vpop.f32.mrf.mxu0
  %v801 = vpop.f32.mrf.mxu0
  %v802 = vadd.f32 0.0, %v801
  %v803 = vpop.f32.mrf.mxu0
  %804 = vmatprep.mubr.bf16.mxu0 %v363
  %805 = vmatmul.mubr.bf16.gmra.mxu0 %v362
  %v806 = vpop.f32.mrf.mxu0
  %v807 = vadd.f32 0.0, %v806
  %v808 = vpop.f32.mrf.mxu0
  %v809 = vpop.f32.mrf.mxu0
  %v810 = vadd.f32 0.0, %v809
  %v811 = vpop.f32.mrf.mxu0
  %812 = vdwg.mxu0
  %vm813 = vcmp.ge.f32.partialorder %v559, 0.0
  %vm814 = vcmp.ge.f32.partialorder %v562, 0.0
  %vm815 = vcmp.ge.f32.partialorder %v567, 0.0
  %vm816 = vcmp.ge.f32.partialorder %v570, 0.0
  %vm817 = vcmp.ge.f32.partialorder %v575, 0.0
  %vm818 = vcmp.ge.f32.partialorder %v578, 0.0
  %vm819 = vcmp.ge.f32.partialorder %v583, 0.0
  %vm820 = vcmp.ge.f32.partialorder %v586, 0.0
  %vm821 = vcmp.ge.f32.partialorder %v591, 0.0
  %vm822 = vcmp.ge.f32.partialorder %v594, 0.0
  %vm823 = vcmp.ge.f32.partialorder %v599, 0.0
  %vm824 = vcmp.ge.f32.partialorder %v602, 0.0
  %vm825 = vcmp.ge.f32.partialorder %v607, 0.0
  %vm826 = vcmp.ge.f32.partialorder %v610, 0.0
  %vm827 = vcmp.ge.f32.partialorder %v615, 0.0
  %vm828 = vcmp.ge.f32.partialorder %v618, 0.0
  %vm829 = vcmp.ge.f32.partialorder %v623, 0.0
  %vm830 = vcmp.ge.f32.partialorder %v626, 0.0
  %vm831 = vcmp.ge.f32.partialorder %v631, 0.0
  %vm832 = vcmp.ge.f32.partialorder %v634, 0.0
  %vm833 = vcmp.ge.f32.partialorder %v639, 0.0
  %vm834 = vcmp.ge.f32.partialorder %v642, 0.0
  %vm835 = vcmp.ge.f32.partialorder %v647, 0.0
  %vm836 = vcmp.ge.f32.partialorder %v650, 0.0
  %vm837 = vcmp.ge.f32.partialorder %v655, 0.0
  %vm838 = vcmp.ge.f32.partialorder %v658, 0.0
  %vm839 = vcmp.ge.f32.partialorder %v663, 0.0
  %vm840 = vcmp.ge.f32.partialorder %v666, 0.0
  %vm841 = vcmp.ge.f32.partialorder %v671, 0.0
  %vm842 = vcmp.ge.f32.partialorder %v674, 0.0
  %vm843 = vcmp.ge.f32.partialorder %v679, 0.0
  %vm844 = vcmp.ge.f32.partialorder %v682, 0.0
  %vm845 = vcmp.ge.f32.partialorder %v687, 0.0
  %vm846 = vcmp.ge.f32.partialorder %v690, 0.0
  %vm847 = vcmp.ge.f32.partialorder %v695, 0.0
  %vm848 = vcmp.ge.f32.partialorder %v698, 0.0
  %vm849 = vcmp.ge.f32.partialorder %v703, 0.0
  %vm850 = vcmp.ge.f32.partialorder %v706, 0.0
  %vm851 = vcmp.ge.f32.partialorder %v711, 0.0
  %vm852 = vcmp.ge.f32.partialorder %v714, 0.0
  %vm853 = vcmp.ge.f32.partialorder %v719, 0.0
  %vm854 = vcmp.ge.f32.partialorder %v722, 0.0
  %vm855 = vcmp.ge.f32.partialorder %v727, 0.0
  %vm856 = vcmp.ge.f32.partialorder %v730, 0.0
  %vm857 = vcmp.ge.f32.partialorder %v735, 0.0
  %vm858 = vcmp.ge.f32.partialorder %v738, 0.0
  %vm859 = vcmp.ge.f32.partialorder %v743, 0.0
  %vm860 = vcmp.ge.f32.partialorder %v746, 0.0
  %vm861 = vcmp.ge.f32.partialorder %v751, 0.0
  %vm862 = vcmp.ge.f32.partialorder %v754, 0.0
  %vm863 = vcmp.ge.f32.partialorder %v759, 0.0
  %vm864 = vcmp.ge.f32.partialorder %v762, 0.0
  %vm865 = vcmp.ge.f32.partialorder %v767, 0.0
  %vm866 = vcmp.ge.f32.partialorder %v770, 0.0
  %vm867 = vcmp.ge.f32.partialorder %v775, 0.0
  %vm868 = vcmp.ge.f32.partialorder %v778, 0.0
  %vm869 = vcmp.ge.f32.partialorder %v783, 0.0
  %vm870 = vcmp.ge.f32.partialorder %v786, 0.0
  %vm871 = vcmp.ge.f32.partialorder %v791, 0.0
  %vm872 = vcmp.ge.f32.partialorder %v794, 0.0
  %vm873 = vcmp.ge.f32.partialorder %v799, 0.0
  %vm874 = vcmp.ge.f32.partialorder %v802, 0.0
  %vm875 = vcmp.ge.f32.partialorder %v807, 0.0
  %vm876 = vcmp.ge.f32.partialorder %v810, 0.0
  %v877 = vmul.f32 %v559, 0.01
  %v878 = vmul.f32 %v562, 0.01
  %v879 = vmul.f32 %v567, 0.01
  %v880 = vmul.f32 %v570, 0.01
  %v881 = vmul.f32 %v575, 0.01
  %v882 = vmul.f32 %v578, 0.01
  %v883 = vmul.f32 %v583, 0.01
  %v884 = vmul.f32 %v586, 0.01
  %v885 = vmul.f32 %v591, 0.01
  %v886 = vmul.f32 %v594, 0.01
  %v887 = vmul.f32 %v599, 0.01
  %v888 = vmul.f32 %v602, 0.01
  %v889 = vmul.f32 %v607, 0.01
  %v890 = vmul.f32 %v610, 0.01
  %v891 = vmul.f32 %v615, 0.01
  %v892 = vmul.f32 %v618, 0.01
  %v893 = vmul.f32 %v623, 0.01
  %v894 = vmul.f32 %v626, 0.01
  %v895 = vmul.f32 %v631, 0.01
  %v896 = vmul.f32 %v634, 0.01
  %v897 = vmul.f32 %v639, 0.01
  %v898 = vmul.f32 %v642, 0.01
  %v899 = vmul.f32 %v647, 0.01
  %v900 = vmul.f32 %v650, 0.01
  %v901 = vmul.f32 %v655, 0.01
  %v902 = vmul.f32 %v658, 0.01
  %v903 = vmul.f32 %v663, 0.01
  %v904 = vmul.f32 %v666, 0.01
  %v905 = vmul.f32 %v671, 0.01
  %v906 = vmul.f32 %v674, 0.01
  %v907 = vmul.f32 %v679, 0.01
  %v908 = vmul.f32 %v682, 0.01
  %v909 = vmul.f32 %v687, 0.01
  %v910 = vmul.f32 %v690, 0.01
  %v911 = vmul.f32 %v695, 0.01
  %v912 = vmul.f32 %v698, 0.01
  %v913 = vmul.f32 %v703, 0.01
  %v914 = vmul.f32 %v706, 0.01
  %v915 = vmul.f32 %v711, 0.01
  %v916 = vmul.f32 %v714, 0.01
  %v917 = vmul.f32 %v719, 0.01
  %v918 = vmul.f32 %v722, 0.01
  %v919 = vmul.f32 %v727, 0.01
  %v920 = vmul.f32 %v730, 0.01
  %v921 = vmul.f32 %v735, 0.01
  %v922 = vmul.f32 %v738, 0.01
  %v923 = vmul.f32 %v743, 0.01
  %v924 = vmul.f32 %v746, 0.01
  %v925 = vmul.f32 %v751, 0.01
  %v926 = vmul.f32 %v754, 0.01
  %v927 = vmul.f32 %v759, 0.01
  %v928 = vmul.f32 %v762, 0.01
  %v929 = vmul.f32 %v767, 0.01
  %v930 = vmul.f32 %v770, 0.01
  %v931 = vmul.f32 %v775, 0.01
  %v932 = vmul.f32 %v778, 0.01
  %v933 = vmul.f32 %v783, 0.01
  %v934 = vmul.f32 %v786, 0.01
  %v935 = vmul.f32 %v791, 0.01
  %v936 = vmul.f32 %v794, 0.01
  %v937 = vmul.f32 %v799, 0.01
  %v938 = vmul.f32 %v802, 0.01
  %v939 = vmul.f32 %v807, 0.01
  %v940 = vmul.f32 %v810, 0.01
  %v941 = vsel %vm813, %v559, %v877
  %v942 = vsel %vm814, %v562, %v878
  %v943 = vsel %vm815, %v567, %v879
  %v944 = vsel %vm816, %v570, %v880
  %v945 = vsel %vm817, %v575, %v881
  %v946 = vsel %vm818, %v578, %v882
  %v947 = vsel %vm819, %v583, %v883
  %v948 = vsel %vm820, %v586, %v884
  %v949 = vsel %vm821, %v591, %v885
  %v950 = vsel %vm822, %v594, %v886
  %v951 = vsel %vm823, %v599, %v887
  %v952 = vsel %vm824, %v602, %v888
  %v953 = vsel %vm825, %v607, %v889
  %v954 = vsel %vm826, %v610, %v890
  %v955 = vsel %vm827, %v615, %v891
  %v956 = vsel %vm828, %v618, %v892
  %v957 = vsel %vm829, %v623, %v893
  %v958 = vsel %vm830, %v626, %v894
  %v959 = vsel %vm831, %v631, %v895
  %v960 = vsel %vm832, %v634, %v896
  %v961 = vsel %vm833, %v639, %v897
  %v962 = vsel %vm834, %v642, %v898
  %v963 = vsel %vm835, %v647, %v899
  %v964 = vsel %vm836, %v650, %v900
  %v965 = vsel %vm837, %v655, %v901
  %v966 = vsel %vm838, %v658, %v902
  %v967 = vsel %vm839, %v663, %v903
  %v968 = vsel %vm840, %v666, %v904
  %v969 = vsel %vm841, %v671, %v905
  %v970 = vsel %vm842, %v674, %v906
  %v971 = vsel %vm843, %v679, %v907
  %v972 = vsel %vm844, %v682, %v908
  %v973 = vsel %vm845, %v687, %v909
  %v974 = vsel %vm846, %v690, %v910
  %v975 = vsel %vm847, %v695, %v911
  %v976 = vsel %vm848, %v698, %v912
  %v977 = vsel %vm849, %v703, %v913
  %v978 = vsel %vm850, %v706, %v914
  %v979 = vsel %vm851, %v711, %v915
  %v980 = vsel %vm852, %v714, %v916
  %v981 = vsel %vm853, %v719, %v917
  %v982 = vsel %vm854, %v722, %v918
  %v983 = vsel %vm855, %v727, %v919
  %v984 = vsel %vm856, %v730, %v920
  %v985 = vsel %vm857, %v735, %v921
  %v986 = vsel %vm858, %v738, %v922
  %v987 = vsel %vm859, %v743, %v923
  %v988 = vsel %vm860, %v746, %v924
  %v989 = vsel %vm861, %v751, %v925
  %v990 = vsel %vm862, %v754, %v926
  %v991 = vsel %vm863, %v759, %v927
  %v992 = vsel %vm864, %v762, %v928
  %v993 = vsel %vm865, %v767, %v929
  %v994 = vsel %vm866, %v770, %v930
  %v995 = vsel %vm867, %v775, %v931
  %v996 = vsel %vm868, %v778, %v932
  %v997 = vsel %vm869, %v783, %v933
  %v998 = vsel %vm870, %v786, %v934
  %v999 = vsel %vm871, %v791, %v935
  %v1000 = vsel %vm872, %v794, %v936
  %v1001 = vsel %vm873, %v799, %v937
  %v1002 = vsel %vm874, %v802, %v938
  %v1003 = vsel %vm875, %v807, %v939
  %v1004 = vsel %vm876, %v810, %v940
  %vm1005 = vcmask 31744
  %1006 = vst.msk [vmem:[%s2] sm:$0xff] %vm1005, %v941
  %1007 = vst.msk [vmem:[%s2 + $0x8] sm:$0xff] %vm1005, %v942
  %1008 = vst.msk [vmem:[%s2 + $0x10] sm:$0xff] %vm1005, %v943
  %1009 = vst.msk [vmem:[%s2 + $0x18] sm:$0xff] %vm1005, %v944
  %1010 = vst.msk [vmem:[%s2 + $0x20] sm:$0xff] %vm1005, %v945
  %1011 = vst.msk [vmem:[%s2 + $0x28] sm:$0xff] %vm1005, %v946
  %1012 = vst.msk [vmem:[%s2 + $0x30] sm:$0xff] %vm1005, %v947
  %1013 = vst.msk [vmem:[%s2 + $0x38] sm:$0xff] %vm1005, %v948
  %1014 = vst.msk [vmem:[%s2 + $0x40] sm:$0xff] %vm1005, %v949
  %1015 = vst.msk [vmem:[%s2 + $0x48] sm:$0xff] %vm1005, %v950
  %1016 = vst.msk [vmem:[%s2 + $0x50] sm:$0xff] %vm1005, %v951
  %1017 = vst.msk [vmem:[%s2 + $0x58] sm:$0xff] %vm1005, %v952
  %1018 = vst.msk [vmem:[%s2 + $0x60] sm:$0xff] %vm1005, %v953
  %1019 = vst.msk [vmem:[%s2 + $0x68] sm:$0xff] %vm1005, %v954
  %1020 = vst.msk [vmem:[%s2 + $0x70] sm:$0xff] %vm1005, %v955
  %1021 = vst.msk [vmem:[%s2 + $0x78] sm:$0xff] %vm1005, %v956
  %1022 = vst.msk [vmem:[%s2 + $0x80] sm:$0xff] %vm1005, %v957
  %1023 = vst.msk [vmem:[%s2 + $0x88] sm:$0xff] %vm1005, %v958
  %1024 = vst.msk [vmem:[%s2 + $0x90] sm:$0xff] %vm1005, %v959
  %1025 = vst.msk [vmem:[%s2 + $0x98] sm:$0xff] %vm1005, %v960
  %1026 = vst.msk [vmem:[%s2 + $0xa0] sm:$0xff] %vm1005, %v961
  %1027 = vst.msk [vmem:[%s2 + $0xa8] sm:$0xff] %vm1005, %v962
  %1028 = vst.msk [vmem:[%s2 + $0xb0] sm:$0xff] %vm1005, %v963
  %1029 = vst.msk [vmem:[%s2 + $0xb8] sm:$0xff] %vm1005, %v964
  %1030 = vst.msk [vmem:[%s2 + $0xc0] sm:$0xff] %vm1005, %v965
  %1031 = vst.msk [vmem:[%s2 + $0xc8] sm:$0xff] %vm1005, %v966
  %1032 = vst.msk [vmem:[%s2 + $0xd0] sm:$0xff] %vm1005, %v967
  %1033 = vst.msk [vmem:[%s2 + $0xd8] sm:$0xff] %vm1005, %v968
  %1034 = vst.msk [vmem:[%s2 + $0xe0] sm:$0xff] %vm1005, %v969
  %1035 = vst.msk [vmem:[%s2 + $0xe8] sm:$0xff] %vm1005, %v970
  %1036 = vst.msk [vmem:[%s2 + $0xf0] sm:$0xff] %vm1005, %v971
  %1037 = vst.msk [vmem:[%s2 + $0xf8] sm:$0xff] %vm1005, %v972
  %1038 = vst.msk [vmem:[%s2 + $0x100] sm:$0xff] %vm1005, %v973
  %1039 = vst.msk [vmem:[%s2 + $0x108] sm:$0xff] %vm1005, %v974
  %1040 = vst.msk [vmem:[%s2 + $0x110] sm:$0xff] %vm1005, %v975
  %1041 = vst.msk [vmem:[%s2 + $0x118] sm:$0xff] %vm1005, %v976
  %1042 = vst.msk [vmem:[%s2 + $0x120] sm:$0xff] %vm1005, %v977
  %1043 = vst.msk [vmem:[%s2 + $0x128] sm:$0xff] %vm1005, %v978
  %1044 = vst.msk [vmem:[%s2 + $0x130] sm:$0xff] %vm1005, %v979
  %1045 = vst.msk [vmem:[%s2 + $0x138] sm:$0xff] %vm1005, %v980
  %1046 = vst.msk [vmem:[%s2 + $0x140] sm:$0xff] %vm1005, %v981
  %1047 = vst.msk [vmem:[%s2 + $0x148] sm:$0xff] %vm1005, %v982
  %1048 = vst.msk [vmem:[%s2 + $0x150] sm:$0xff] %vm1005, %v983
  %1049 = vst.msk [vmem:[%s2 + $0x158] sm:$0xff] %vm1005, %v984
  %1050 = vst.msk [vmem:[%s2 + $0x160] sm:$0xff] %vm1005, %v985
  %1051 = vst.msk [vmem:[%s2 + $0x168] sm:$0xff] %vm1005, %v986
  %1052 = vst.msk [vmem:[%s2 + $0x170] sm:$0xff] %vm1005, %v987
  %1053 = vst.msk [vmem:[%s2 + $0x178] sm:$0xff] %vm1005, %v988
  %1054 = vst.msk [vmem:[%s2 + $0x180] sm:$0xff] %vm1005, %v989
  %1055 = vst.msk [vmem:[%s2 + $0x188] sm:$0xff] %vm1005, %v990
  %1056 = vst.msk [vmem:[%s2 + $0x190] sm:$0xff] %vm1005, %v991
  %1057 = vst.msk [vmem:[%s2 + $0x198] sm:$0xff] %vm1005, %v992
  %1058 = vst.msk [vmem:[%s2 + $0x1a0] sm:$0xff] %vm1005, %v993
  %1059 = vst.msk [vmem:[%s2 + $0x1a8] sm:$0xff] %vm1005, %v994
  %1060 = vst.msk [vmem:[%s2 + $0x1b0] sm:$0xff] %vm1005, %v995
  %1061 = vst.msk [vmem:[%s2 + $0x1b8] sm:$0xff] %vm1005, %v996
  %1062 = vst.msk [vmem:[%s2 + $0x1c0] sm:$0xff] %vm1005, %v997
  %1063 = vst.msk [vmem:[%s2 + $0x1c8] sm:$0xff] %vm1005, %v998
  %1064 = vst.msk [vmem:[%s2 + $0x1d0] sm:$0xff] %vm1005, %v999
  %1065 = vst.msk [vmem:[%s2 + $0x1d8] sm:$0xff] %vm1005, %v1000
  %1066 = vst.msk [vmem:[%s2 + $0x1e0] sm:$0xff] %vm1005, %v1001
  %1067 = vst.msk [vmem:[%s2 + $0x1e8] sm:$0xff] %vm1005, %v1002
  %1068 = vst.msk [vmem:[%s2 + $0x1f0] sm:$0xff] %vm1005, %v1003
  %1069 = vst.msk [vmem:[%s2 + $0x1f8] sm:$0xff] %vm1005, %v1004
  // Predicated region
  $region10: #{_lambda_.3} parent=0 // pred_check
    _
  $region11: #{_lambda_.3} parent=0 // pred_check_branch
    %1071 = sbr.rel (0) target = $region13
  $region12: #{_lambda_.3} parent=0 // pred_region
    _
  $region13: #{_lambda_.3} parent=0 // pred_fallthru
    _
  // Predicated region
  $region14: #{_lambda_.3} parent=0 // pred_check
    _
  $region15: #{_lambda_.3} parent=0 // pred_check_branch
    %1073 = sbr.rel (0) target = $region17
  $region16: #{_lambda_.3} parent=0 // pred_region
    _
  $region17: #{_lambda_.3} parent=0 // pred_fallthru
    _

// kernel: _lambda_.4
$region0: #{_lambda_.4}
  #allocation0 [shape = 'u32[]', space=smem, size = 0x4, offset = 0x4, fixed_abs, tag = 'smem constant byte address 0x4 - core index']
  #allocation1 [shape = 'u32[144,128]{1,0:T(1,128)}', space=vmem, size = 0x12000, scoped, tag = 'internal scratch']
  %s0 = inlined_call_operand.vmem [shape: bf16[104,128], index: 0, kind: input, shape index: {}]
  %s1 = inlined_call_operand.vmem [shape: bf16[128,128], index: 1, kind: input, shape index: {}]
  %s2 = inlined_call_operand.vmem [shape: f32[1,4], index: 2, kind: input, shape index: {}]
  %s3 = inlined_call_operand.vmem [shape: f32[1,4], index: 3, kind: input, shape index: {}]
  %s4 = inlined_call_operand.vmem [shape: f32[104,4], index: 4, kind: output, shape index: {}]
  %s5 = sld [smem:[#allocation0]]
  $region30: #{_lambda_.4} parent=0
    _
  %s7 = ssub.s32 1, %s5
  %s8 = scalar_select 0, %s7, %s5
  // Predicated region
  $region2: #{_lambda_.4} parent=0 // pred_check
    _
  $region3: #{_lambda_.4} parent=0 // pred_check_branch
    %10 = sbr.rel (0) target = $region5
  $region4: #{_lambda_.4} parent=0 // pred_region
    _
  $region5: #{_lambda_.4} parent=0 // pred_fallthru
    _
  // Predicated region
  $region6: #{_lambda_.4} parent=0 // pred_check
    _
  $region7: #{_lambda_.4} parent=0 // pred_check_branch
    %12 = sbr.rel (0) target = $region9
  $region8: #{_lambda_.4} parent=0 // pred_region
    _
  $region9: #{_lambda_.4} parent=0 // pred_fallthru
    _
  // Predicated region
  $region10: #{_lambda_.4} parent=0 // pred_check
    _
  $region11: #{_lambda_.4} parent=0 // pred_check_branch
    %14 = sbr.rel (0) target = $region13
  $region12: #{_lambda_.4} parent=0 // pred_region
    _
  $region13: #{_lambda_.4} parent=0 // pred_fallthru
    _
  // Predicated region
  $region14: #{_lambda_.4} parent=0 // pred_check
    _
  $region15: #{_lambda_.4} parent=0 // pred_check_branch
    %16 = sbr.rel (0) target = $region17
  $region16: #{_lambda_.4} parent=0 // pred_region
    _
  $region17: #{_lambda_.4} parent=0 // pred_fallthru
    _
  %v18 = vld [vmem:[%s0] sm:$0xf]
  %v19 = vld [vmem:[%s0 + $0x4] sm:$0xf]
  %v20 = vld [vmem:[%s0 + $0x8] sm:$0xf]
  %v21 = vld [vmem:[%s0 + $0xc] sm:$0xf]
  %v22 = vld [vmem:[%s0 + $0x10] sm:$0xf]
  %v23 = vld [vmem:[%s0 + $0x14] sm:$0xf]
  %v24 = vld [vmem:[%s0 + $0x18] sm:$0xf]
  %v25 = vld [vmem:[%s0 + $0x1c] sm:$0xf]
  %v26 = vld [vmem:[%s0 + $0x20] sm:$0xf]
  %v27 = vld [vmem:[%s0 + $0x24] sm:$0xf]
  %v28 = vld [vmem:[%s0 + $0x28] sm:$0xf]
  %v29 = vld [vmem:[%s0 + $0x2c] sm:$0xf]
  %v30 = vld [vmem:[%s0 + $0x30] sm:$0xf]
  %v31 = vld [vmem:[%s1] sm:$0xf]
  %v32 = vld [vmem:[%s1 + $0x4] sm:$0xf]
  %v33 = vld [vmem:[%s1 + $0x8] sm:$0xf]
  %v34 = vld [vmem:[%s1 + $0xc] sm:$0xf]
  %v35 = vld [vmem:[%s1 + $0x10] sm:$0xf]
  %v36 = vld [vmem:[%s1 + $0x14] sm:$0xf]
  %v37 = vld [vmem:[%s1 + $0x18] sm:$0xf]
  %v38 = vld [vmem:[%s1 + $0x1c] sm:$0xf]
  %v39 = vld [vmem:[%s1 + $0x20] sm:$0xf]
  %v40 = vld [vmem:[%s1 + $0x24] sm:$0xf]
  %v41 = vld [vmem:[%s1 + $0x28] sm:$0xf]
  %v42 = vld [vmem:[%s1 + $0x2c] sm:$0xf]
  %v43 = vld [vmem:[%s1 + $0x30] sm:$0xf]
  %v44 = vld [vmem:[%s1 + $0x34] sm:$0xf]
  %v45 = vld [vmem:[%s1 + $0x38] sm:$0xf]
  %v46 = vld [vmem:[%s1 + $0x3c] sm:$0xf]
  %v60 = vunpack.c.l.b16 %v18
  %v61 = vunpack.c.l.b16 %v19
  %v62 = vunpack.c.l.b16 %v20
  %v63 = vunpack.c.l.b16 %v21
  %v64 = vunpack.c.l.b16 %v22
  %v65 = vunpack.c.l.b16 %v23
  %v66 = vunpack.c.l.b16 %v24
  %v67 = vunpack.c.l.b16 %v25
  %v68 = vunpack.c.l.b16 %v26
  %v69 = vunpack.c.l.b16 %v27
  %v70 = vunpack.c.l.b16 %v28
  %v71 = vunpack.c.l.b16 %v29
  %v72 = vunpack.c.l.b16 %v30
  %v73 = vpack.c.b16 %v61, %v60
  %v74 = vpack.c.b16 %v63, %v62
  %v75 = vpack.c.b16 %v65, %v64
  %v76 = vpack.c.b16 %v67, %v66
  %v77 = vpack.c.b16 %v69, %v68
  %v78 = vpack.c.b16 %v71, %v70
  %v79 = vpack.c.b16 %v72, %v72
  %v103 = vunpack.c.l.b16 %v31
  %v104 = vunpack.c.l.b16 %v32
  %v105 = vunpack.c.l.b16 %v33
  %v106 = vunpack.c.l.b16 %v34
  %v107 = vunpack.c.l.b16 %v35
  %v108 = vunpack.c.l.b16 %v36
  %v109 = vunpack.c.l.b16 %v37
  %v110 = vunpack.c.l.b16 %v38
  %v111 = vunpack.c.l.b16 %v39
  %v112 = vunpack.c.l.b16 %v40
  %v113 = vunpack.c.l.b16 %v41
  %v114 = vunpack.c.l.b16 %v42
  %v115 = vunpack.c.l.b16 %v43
  %v116 = vunpack.c.l.b16 %v44
  %v117 = vunpack.c.l.b16 %v45
  %v118 = vunpack.c.l.b16 %v46
  %v119 = vpack.c.b16 %v104, %v103
  %v120 = vpack.c.b16 %v106, %v105
  %v121 = vpack.c.b16 %v108, %v107
  %v122 = vpack.c.b16 %v110, %v109
  %v123 = vpack.c.b16 %v112, %v111
  %v124 = vpack.c.b16 %v114, %v113
  %v125 = vpack.c.b16 %v116, %v115
  %v126 = vpack.c.b16 %v118, %v117
  %135 = vmatprep.subr.bf16.mxu0 0
  %136 = vmatpush1.bf16.msra.mxu0 %v126
  %137 = vmatprep.subr.bf16.mxu0 0
  %138 = vmatpush1.bf16.msra.mxu0 %v125
  %139 = vmatprep.subr.bf16.mxu0 0
  %140 = vmatpush1.bf16.msra.mxu0 %v124
  %141 = vmatprep.subr.bf16.mxu0 0
  %142 = vmatpush1.bf16.msra.mxu0 %v123
  %143 = vmatprep.subr.bf16.mxu0 0
  %144 = vmatpush1.bf16.msra.mxu0 %v122
  %145 = vmatprep.subr.bf16.mxu0 0
  %146 = vmatpush1.bf16.msra.mxu0 %v121
  %147 = vmatprep.subr.bf16.mxu0 0
  %148 = vmatpush1.bf16.msra.mxu0 %v120
  %149 = vmatprep.subr.bf16.mxu0 0
  %150 = vmatpush1.bf16.msra.mxu0 %v119
  %151 = vmatprep.subr.bf16.mxu0 0
  %152 = vmatpush2.bf16.msra.mxu0 0
  %153 = vmatprep.subr.bf16.mxu0 0
  %154 = vmatpush2.bf16.msra.mxu0 0
  %155 = vmatprep.subr.bf16.mxu0 0
  %156 = vmatpush2.bf16.msra.mxu0 0
  %157 = vmatprep.subr.bf16.mxu0 0
  %158 = vmatpush2.bf16.msra.mxu0 0
  %159 = vmatprep.subr.bf16.mxu0 0
  %160 = vmatpush2.bf16.msra.mxu0 0
  %161 = vmatprep.subr.bf16.mxu0 0
  %162 = vmatpush2.bf16.msra.mxu0 0
  %163 = vmatprep.subr.bf16.mxu0 0
  %164 = vmatpush2.bf16.msra.mxu0 0
  %165 = vmatprep.subr.bf16.mxu0 0
  %166 = vmatpush2.bf16.msra.mxu0 0
  %167 = vmatprep.mubr.bf16.mxu0 0
  %168 = vmatmul.mubr.bf16.gmra.mxu0 %v73
  %v169 = vpop.f32.mrf.mxu0
  %v170 = vadd.f32 0.0, %v169
  %v171 = vpop.f32.mrf.mxu0
  %v172 = vpop.f32.mrf.mxu0
  %v173 = vadd.f32 0.0, %v172
  %v174 = vpop.f32.mrf.mxu0
  %175 = vmatprep.mubr.bf16.mxu0 0
  %176 = vmatmul.mubr.bf16.gmra.mxu0 %v74
  %v177 = vpop.f32.mrf.mxu0
  %v178 = vadd.f32 0.0, %v177
  %v179 = vpop.f32.mrf.mxu0
  %v180 = vpop.f32.mrf.mxu0
  %v181 = vadd.f32 0.0, %v180
  %v182 = vpop.f32.mrf.mxu0
  %183 = vmatprep.mubr.bf16.mxu0 0
  %184 = vmatmul.mubr.bf16.gmra.mxu0 %v75
  %v185 = vpop.f32.mrf.mxu0
  %v186 = vadd.f32 0.0, %v185
  %v187 = vpop.f32.mrf.mxu0
  %v188 = vpop.f32.mrf.mxu0
  %v189 = vadd.f32 0.0, %v188
  %v190 = vpop.f32.mrf.mxu0
  %191 = vmatprep.mubr.bf16.mxu0 0
  %192 = vmatmul.mubr.bf16.gmra.mxu0 %v76
  %v193 = vpop.f32.mrf.mxu0
  %v194 = vadd.f32 0.0, %v193
  %v195 = vpop.f32.mrf.mxu0
  %v196 = vpop.f32.mrf.mxu0
  %v197 = vadd.f32 0.0, %v196
  %v198 = vpop.f32.mrf.mxu0
  %199 = vmatprep.mubr.bf16.mxu0 0
  %200 = vmatmul.mubr.bf16.gmra.mxu0 %v77
  %v201 = vpop.f32.mrf.mxu0
  %v202 = vadd.f32 0.0, %v201
  %v203 = vpop.f32.mrf.mxu0
  %v204 = vpop.f32.mrf.mxu0
  %v205 = vadd.f32 0.0, %v204
  %v206 = vpop.f32.mrf.mxu0
  %207 = vmatprep.mubr.bf16.mxu0 0
  %208 = vmatmul.mubr.bf16.gmra.mxu0 %v78
  %v209 = vpop.f32.mrf.mxu0
  %v210 = vadd.f32 0.0, %v209
  %v211 = vpop.f32.mrf.mxu0
  %v212 = vpop.f32.mrf.mxu0
  %v213 = vadd.f32 0.0, %v212
  %v214 = vpop.f32.mrf.mxu0
  %215 = vmatprep.mubr.bf16.mxu0 0
  %216 = vmatmul.mubr.bf16.gmra.mxu0 %v79
  %v217 = vpop.f32.mrf.mxu0
  %v218 = vadd.f32 0.0, %v217
  %v219 = vpop.f32.mrf.mxu0
  %v220 = vpop.f32.mrf.mxu0
  %v221 = vpop.f32.mrf.mxu0
  %222 = vdwg.mxu0
  %s223 = smul.u32 0, 104
  %s224 = scalar_lea.vmem %s4, %s223
  %vm225 = vcmask 31744
  %226 = vst.msk [vmem:[%s224] sm:$0xff] %vm225, %v170
  %227 = vst.msk [vmem:[%s224 + $0x8] sm:$0xff] %vm225, %v173
  %228 = vst.msk [vmem:[%s224 + $0x10] sm:$0xff] %vm225, %v178
  %229 = vst.msk [vmem:[%s224 + $0x18] sm:$0xff] %vm225, %v181
  %230 = vst.msk [vmem:[%s224 + $0x20] sm:$0xff] %vm225, %v186
  %231 = vst.msk [vmem:[%s224 + $0x28] sm:$0xff] %vm225, %v189
  %232 = vst.msk [vmem:[%s224 + $0x30] sm:$0xff] %vm225, %v194
  %233 = vst.msk [vmem:[%s224 + $0x38] sm:$0xff] %vm225, %v197
  %234 = vst.msk [vmem:[%s224 + $0x40] sm:$0xff] %vm225, %v202
  %235 = vst.msk [vmem:[%s224 + $0x48] sm:$0xff] %vm225, %v205
  %236 = vst.msk [vmem:[%s224 + $0x50] sm:$0xff] %vm225, %v210
  %237 = vst.msk [vmem:[%s224 + $0x58] sm:$0xff] %vm225, %v213
  %238 = vst.msk [vmem:[%s224 + $0x60] sm:$0xff] %vm225, %v218
  %p239 = scmp.eq.s32.totalorder 0, 0
  // Predicated region
  $region18: #{_lambda_.4} parent=0 // pred_check
    %p240 = pneg %p239
  $region19: #{_lambda_.4} parent=0 // pred_check_branch
    %242 = sbr.rel (%p240) target = $region21
  $region20: #{_lambda_.4} parent=0 // pred_region
    %v243 = vld [vmem:[%s4] sm:$0xff]
    %v244 = vld [vmem:[%s4 + $0x8] sm:$0xff]
    %v245 = vld [vmem:[%s4 + $0x10] sm:$0xff]
    %v246 = vld [vmem:[%s4 + $0x18] sm:$0xff]
    %v247 = vld [vmem:[%s4 + $0x20] sm:$0xff]
    %v248 = vld [vmem:[%s4 + $0x28] sm:$0xff]
    %v249 = vld [vmem:[%s4 + $0x30] sm:$0xff]
    %v250 = vld [vmem:[%s4 + $0x38] sm:$0xff]
    %v251 = vld [vmem:[%s4 + $0x40] sm:$0xff]
    %v252 = vld [vmem:[%s4 + $0x48] sm:$0xff]
    %v253 = vld [vmem:[%s4 + $0x50] sm:$0xff]
    %v254 = vld [vmem:[%s4 + $0x58] sm:$0xff]
    %v255 = vld [vmem:[%s4 + $0x60] sm:$0xff]
    %v256 = vlaneseq
    %v257 = vshrl.u32 %v256, 7
    %v258 = vadd.s32 %v257, 8
    %v259 = vadd.s32 %v257, 16
    %v260 = vadd.s32 %v257, 24
    %v261 = vadd.s32 %v257, 32
    %v262 = vadd.s32 %v257, 40
    %v263 = vadd.s32 %v257, 48
    %v264 = vadd.s32 %v257, 56
    %v265 = vadd.s32 %v257, 64
    %v266 = vadd.s32 %v257, 72
    %v267 = vadd.s32 %v257, 80
    %v268 = vadd.s32 %v257, 88
    %v269 = vadd.s32 %v257, 96
    %vm270 = vcmp.lt.s32.totalorder %v257, 98
    %vm271 = vcmp.lt.s32.totalorder %v258, 98
    %vm272 = vcmp.lt.s32.totalorder %v259, 98
    %vm273 = vcmp.lt.s32.totalorder %v260, 98
    %vm274 = vcmp.lt.s32.totalorder %v261, 98
    %vm275 = vcmp.lt.s32.totalorder %v262, 98
    %vm276 = vcmp.lt.s32.totalorder %v263, 98
    %vm277 = vcmp.lt.s32.totalorder %v264, 98
    %vm278 = vcmp.lt.s32.totalorder %v265, 98
    %vm279 = vcmp.lt.s32.totalorder %v266, 98
    %vm280 = vcmp.lt.s32.totalorder %v267, 98
    %vm281 = vcmp.lt.s32.totalorder %v268, 98
    %vm282 = vcmp.lt.s32.totalorder %v269, 98
    %v283 = vsel %vm270, 1, 0
    %v284 = vsel %vm271, 1, 0
    %v285 = vsel %vm272, 1, 0
    %v286 = vsel %vm273, 1, 0
    %v287 = vsel %vm274, 1, 0
    %v288 = vsel %vm275, 1, 0
    %v289 = vsel %vm276, 1, 0
    %v290 = vsel %vm277, 1, 0
    %v291 = vsel %vm278, 1, 0
    %v292 = vsel %vm279, 1, 0
    %v293 = vsel %vm280, 1, 0
    %v294 = vsel %vm281, 1, 0
    %v295 = vsel %vm282, 1, 0
    %v296 = vcvt.s32.f32 %v283
    %v297 = vcvt.s32.f32 %v284
    %v298 = vcvt.s32.f32 %v285
    %v299 = vcvt.s32.f32 %v286
    %v300 = vcvt.s32.f32 %v287
    %v301 = vcvt.s32.f32 %v288
    %v302 = vcvt.s32.f32 %v289
    %v303 = vcvt.s32.f32 %v290
    %v304 = vcvt.s32.f32 %v291
    %v305 = vcvt.s32.f32 %v292
    %v306 = vcvt.s32.f32 %v293
    %v307 = vcvt.s32.f32 %v294
    %v308 = vcvt.s32.f32 %v295
    %v309 = vmul.f32 %v243, %v296
    %v310 = vmul.f32 %v244, %v297
    %v311 = vmul.f32 %v245, %v298
    %v312 = vmul.f32 %v246, %v299
    %v313 = vmul.f32 %v247, %v300
    %v314 = vmul.f32 %v248, %v301
    %v315 = vmul.f32 %v249, %v302
    %v316 = vmul.f32 %v250, %v303
    %v317 = vmul.f32 %v251, %v304
    %v318 = vmul.f32 %v252, %v305
    %v319 = vmul.f32 %v253, %v306
    %v320 = vmul.f32 %v254, %v307
    %v321 = vmul.f32 %v255, %v308
    %v322 = vsel %vm225, %v309, 0.0
    %v323 = vsel %vm225, %v310, 0.0
    %v324 = vadd.f32 %v322, %v323
    %v325 = vsel %vm225, %v311, 0.0
    %v326 = vadd.f32 %v324, %v325
    %v327 = vsel %vm225, %v312, 0.0
    %v328 = vadd.f32 %v326, %v327
    %v329 = vsel %vm225, %v313, 0.0
    %v330 = vadd.f32 %v328, %v329
    %v331 = vsel %vm225, %v314, 0.0
    %v332 = vadd.f32 %v330, %v331
    %v333 = vsel %vm225, %v315, 0.0
    %v334 = vadd.f32 %v332, %v333
    %v335 = vsel %vm225, %v316, 0.0
    %v336 = vadd.f32 %v334, %v335
    %v337 = vsel %vm225, %v317, 0.0
    %v338 = vadd.f32 %v336, %v337
    %v339 = vsel %vm225, %v318, 0.0
    %v340 = vadd.f32 %v338, %v339
    %v341 = vsel %vm225, %v319, 0.0
    %v342 = vadd.f32 %v340, %v341
    %v343 = vsel %vm225, %v320, 0.0
    %v344 = vadd.f32 %v342, %v343
    %v345 = vsel %vm225, %v321, 0.0
    %v346 = vadd.f32 %v344, %v345
    %v347 = vrot.slane %v346, 4
    %v348 = vadd.f32 %v346, %v347
    %v349 = vrot.slane %v348, 2
    %v350 = vadd.f32 %v348, %v349
    %v351 = vrot.slane %v350, 1
    %v352 = vadd.f32 %v350, %v351
    %v353 = vmul.f32 %v352, 0.010204081
    %v354 = vsub.f32 %v243, %v353
    %v355 = vsub.f32 %v244, %v353
    %v356 = vsub.f32 %v245, %v353
    %v357 = vsub.f32 %v246, %v353
    %v358 = vsub.f32 %v247, %v353
    %v359 = vsub.f32 %v248, %v353
    %v360 = vsub.f32 %v249, %v353
    %v361 = vsub.f32 %v250, %v353
    %v362 = vsub.f32 %v251, %v353
    %v363 = vsub.f32 %v252, %v353
    %v364 = vsub.f32 %v253, %v353
    %v365 = vsub.f32 %v254, %v353
    %v366 = vsub.f32 %v255, %v353
    %v367 = vmul.f32 %v354, %v296
    %v368 = vmul.f32 %v355, %v297
    %v369 = vmul.f32 %v356, %v298
    %v370 = vmul.f32 %v357, %v299
    %v371 = vmul.f32 %v358, %v300
    %v372 = vmul.f32 %v359, %v301
    %v373 = vmul.f32 %v360, %v302
    %v374 = vmul.f32 %v361, %v303
    %v375 = vmul.f32 %v362, %v304
    %v376 = vmul.f32 %v363, %v305
    %v377 = vmul.f32 %v364, %v306
    %v378 = vmul.f32 %v365, %v307
    %v379 = vmul.f32 %v366, %v308
    %v380 = vmul.f32 %v367, %v367
    %v381 = vmul.f32 %v368, %v368
    %v382 = vmul.f32 %v369, %v369
    %v383 = vmul.f32 %v370, %v370
    %v384 = vmul.f32 %v371, %v371
    %v385 = vmul.f32 %v372, %v372
    %v386 = vmul.f32 %v373, %v373
    %v387 = vmul.f32 %v374, %v374
    %v388 = vmul.f32 %v375, %v375
    %v389 = vmul.f32 %v376, %v376
    %v390 = vmul.f32 %v377, %v377
    %v391 = vmul.f32 %v378, %v378
    %v392 = vmul.f32 %v379, %v379
    %v393 = vsel %vm225, %v380, 0.0
    %v394 = vsel %vm225, %v381, 0.0
    %v395 = vadd.f32 %v393, %v394
    %v396 = vsel %vm225, %v382, 0.0
    %v397 = vadd.f32 %v395, %v396
    %v398 = vsel %vm225, %v383, 0.0
    %v399 = vadd.f32 %v397, %v398
    %v400 = vsel %vm225, %v384, 0.0
    %v401 = vadd.f32 %v399, %v400
    %v402 = vsel %vm225, %v385, 0.0
    %v403 = vadd.f32 %v401, %v402
    %v404 = vsel %vm225, %v386, 0.0
    %v405 = vadd.f32 %v403, %v404
    %v406 = vsel %vm225, %v387, 0.0
    %v407 = vadd.f32 %v405, %v406
    %v408 = vsel %vm225, %v388, 0.0
    %v409 = vadd.f32 %v407, %v408
    %v410 = vsel %vm225, %v389, 0.0
    %v411 = vadd.f32 %v409, %v410
    %v412 = vsel %vm225, %v390, 0.0
    %v413 = vadd.f32 %v411, %v412
    %v414 = vsel %vm225, %v391, 0.0
    %v415 = vadd.f32 %v413, %v414
    %v416 = vsel %vm225, %v392, 0.0
    %v417 = vadd.f32 %v415, %v416
    %v418 = vrot.slane %v417, 4
    %v419 = vadd.f32 %v417, %v418
    %v420 = vrot.slane %v419, 2
    %v421 = vadd.f32 %v419, %v420
    %v422 = vrot.slane %v421, 1
    %v423 = vadd.f32 %v421, %v422
    %v424 = vmul.f32 %v423, 0.010204081
    %v425 = vadd.f32 %v424, 1e-05
    %v426 = vrsqrt.pop %v425
    %v427 = vld [vmem:[%s2] sm:$0x1]
    %v428 = vmul.f32 %v426, %v427
    %v429 = vld [vmem:[%s3] sm:$0x1]
    %v430 = vmul.f32 %v353, %v428
    %v431 = vsub.f32 %v429, %v430
    %v432 = vlaneseq
    %v433 = vshrl.u32 %v432, 7
    %v434 = vsub.s32 0, %v433
    %v435 = vrot.slane %v428, %v434
    %v436 = vmul.f32 %v243, %v435
    %v437 = vmul.f32 %v244, %v435
    %v438 = vmul.f32 %v245, %v435
    %v439 = vmul.f32 %v246, %v435
    %v440 = vmul.f32 %v247, %v435
    %v441 = vmul.f32 %v248, %v435
    %v442 = vmul.f32 %v249, %v435
    %v443 = vmul.f32 %v250, %v435
    %v444 = vmul.f32 %v251, %v435
    %v445 = vmul.f32 %v252, %v435
    %v446 = vmul.f32 %v253, %v435
    %v447 = vmul.f32 %v254, %v435
    %v448 = vmul.f32 %v255, %v435
    %v450 = vlaneseq
    %v451 = vshrl.u32 %v450, 7
    %v452 = vsub.s32 0, %v451
    %v453 = vrot.slane %v431, %v452
    %v455 = vadd.f32 %v436, %v453
    %v456 = vadd.f32 %v437, %v453
    %v457 = vadd.f32 %v438, %v453
    %v458 = vadd.f32 %v439, %v453
    %v459 = vadd.f32 %v440, %v453
    %v460 = vadd.f32 %v441, %v453
    %v461 = vadd.f32 %v442, %v453
    %v462 = vadd.f32 %v443, %v453
    %v463 = vadd.f32 %v444, %v453
    %v464 = vadd.f32 %v445, %v453
    %v465 = vadd.f32 %v446, %v453
    %v466 = vadd.f32 %v447, %v453
    %v467 = vadd.f32 %v448, %v453
    %vm468 = vcmp.ge.f32.partialorder %v455, 0.0
    %vm469 = vcmp.ge.f32.partialorder %v456, 0.0
    %vm470 = vcmp.ge.f32.partialorder %v457, 0.0
    %vm471 = vcmp.ge.f32.partialorder %v458, 0.0
    %vm472 = vcmp.ge.f32.partialorder %v459, 0.0
    %vm473 = vcmp.ge.f32.partialorder %v460, 0.0
    %vm474 = vcmp.ge.f32.partialorder %v461, 0.0
    %vm475 = vcmp.ge.f32.partialorder %v462, 0.0
    %vm476 = vcmp.ge.f32.partialorder %v463, 0.0
    %vm477 = vcmp.ge.f32.partialorder %v464, 0.0
    %vm478 = vcmp.ge.f32.partialorder %v465, 0.0
    %vm479 = vcmp.ge.f32.partialorder %v466, 0.0
    %vm480 = vcmp.ge.f32.partialorder %v467, 0.0
    %v481 = vmul.f32 %v455, 0.01
    %v482 = vmul.f32 %v456, 0.01
    %v483 = vmul.f32 %v457, 0.01
    %v484 = vmul.f32 %v458, 0.01
    %v485 = vmul.f32 %v459, 0.01
    %v486 = vmul.f32 %v460, 0.01
    %v487 = vmul.f32 %v461, 0.01
    %v488 = vmul.f32 %v462, 0.01
    %v489 = vmul.f32 %v463, 0.01
    %v490 = vmul.f32 %v464, 0.01
    %v491 = vmul.f32 %v465, 0.01
    %v492 = vmul.f32 %v466, 0.01
    %v493 = vmul.f32 %v467, 0.01
    %v494 = vsel %vm468, %v455, %v481
    %v495 = vsel %vm469, %v456, %v482
    %v496 = vsel %vm470, %v457, %v483
    %v497 = vsel %vm471, %v458, %v484
    %v498 = vsel %vm472, %v459, %v485
    %v499 = vsel %vm473, %v460, %v486
    %v500 = vsel %vm474, %v461, %v487
    %v501 = vsel %vm475, %v462, %v488
    %v502 = vsel %vm476, %v463, %v489
    %v503 = vsel %vm477, %v464, %v490
    %v504 = vsel %vm478, %v465, %v491
    %v505 = vsel %vm479, %v466, %v492
    %v506 = vsel %vm480, %v467, %v493
    %507 = vst.msk [vmem:[%s4] sm:$0xff] %vm225, %v494
    %508 = vst.msk [vmem:[%s4 + $0x8] sm:$0xff] %vm225, %v495
    %509 = vst.msk [vmem:[%s4 + $0x10] sm:$0xff] %vm225, %v496
    %510 = vst.msk [vmem:[%s4 + $0x18] sm:$0xff] %vm225, %v497
    %511 = vst.msk [vmem:[%s4 + $0x20] sm:$0xff] %vm225, %v498
    %512 = vst.msk [vmem:[%s4 + $0x28] sm:$0xff] %vm225, %v499
    %513 = vst.msk [vmem:[%s4 + $0x30] sm:$0xff] %vm225, %v500
    %514 = vst.msk [vmem:[%s4 + $0x38] sm:$0xff] %vm225, %v501
    %515 = vst.msk [vmem:[%s4 + $0x40] sm:$0xff] %vm225, %v502
    %516 = vst.msk [vmem:[%s4 + $0x48] sm:$0xff] %vm225, %v503
    %517 = vst.msk [vmem:[%s4 + $0x50] sm:$0xff] %vm225, %v504
    %518 = vst.msk [vmem:[%s4 + $0x58] sm:$0xff] %vm225, %v505
    %519 = vst.msk [vmem:[%s4 + $0x60] sm:$0xff] %vm225, %v506
  $region21: #{_lambda_.4} parent=0 // pred_fallthru
    _
  // Predicated region
  $region22: #{_lambda_.4} parent=0 // pred_check
    _
  $region23: #{_lambda_.4} parent=0 // pred_check_branch
    %521 = sbr.rel (0) target = $region25
  $region24: #{_lambda_.4} parent=0 // pred_region
    _
  $region25: #{_lambda_.4} parent=0 // pred_fallthru
    _
  // Predicated region
  $region26: #{_lambda_.4} parent=0 // pred_check
    _
  $region27: #{_lambda_.4} parent=0 // pred_check_branch
    %523 = sbr.rel (0) target = $region29
  $region28: #{_lambda_.4} parent=0 // pred_region
    _
  $region29: #{_lambda_.4} parent=0 // pred_fallthru
    _

// kernel: _lambda_.5
$region0: #{_lambda_.5}
  #allocation0 [shape = 'u32[]', space=smem, size = 0x4, offset = 0x4, fixed_abs, tag = 'smem constant byte address 0x4 - core index']
  #allocation1 [shape = 'u32[144,128]{1,0:T(1,128)}', space=vmem, size = 0x12000, scoped, tag = 'internal scratch']
  #allocation2 [shape = 'f32[8,8]{1,0:T(8,128)}', space=vmem, size = 0x1000, scoped, tag = 'scratch operand']
  #allocation3 [shape = 'f32[1,1]{1,0:T(1,128)S(1)}', space=vmem, size = 0x200, scoped, tag = 'scoped memory for _lambda_.5']
  %s0 = inlined_call_operand.vmem [shape: bf16[8,128], index: 0, kind: input, shape index: {}]
  %s1 = inlined_call_operand.vmem [shape: bf16[128,128], index: 1, kind: input, shape index: {}]
  %s2 = inlined_call_operand.vmem [shape: f32[1,8], index: 2, kind: input, shape index: {}]
  %s3 = inlined_call_operand.vmem [shape: f32[1,8], index: 3, kind: input, shape index: {}]
  %s4 = inlined_call_operand.vmem [shape: f32[1,8], index: 4, kind: input, shape index: {}]
  %s5 = inlined_call_operand.<no memory space> [shape: f32[1,1], index: 5, kind: input, shape index: {}]
  %s6 = inlined_call_operand.vmem [shape: f32[8,1], index: 6, kind: output, shape index: {}]
  %s7 = sld [smem:[#allocation0]]
  $region38: #{_lambda_.5} parent=0
    _
  %s9 = ssub.s32 1, %s7
  %s10 = scalar_select 0, %s9, %s7
  %v11 = vstv %s5
  %12 = vst [vmem:[#allocation3] sm:$0x1] %v11
  // Predicated region
  $region2: #{_lambda_.5} parent=0 // pred_check
    _
  $region3: #{_lambda_.5} parent=0 // pred_check_branch
    %14 = sbr.rel (0) target = $region5
  $region4: #{_lambda_.5} parent=0 // pred_region
    _
  $region5: #{_lambda_.5} parent=0 // pred_fallthru
    _
  // Predicated region
  $region6: #{_lambda_.5} parent=0 // pred_check
    _
  $region7: #{_lambda_.5} parent=0 // pred_check_branch
    %16 = sbr.rel (0) target = $region9
  $region8: #{_lambda_.5} parent=0 // pred_region
    _
  $region9: #{_lambda_.5} parent=0 // pred_fallthru
    _
  // Predicated region
  $region10: #{_lambda_.5} parent=0 // pred_check
    _
  $region11: #{_lambda_.5} parent=0 // pred_check_branch
    %18 = sbr.rel (0) target = $region13
  $region12: #{_lambda_.5} parent=0 // pred_region
    _
  $region13: #{_lambda_.5} parent=0 // pred_fallthru
    _
  // Predicated region
  $region14: #{_lambda_.5} parent=0 // pred_check
    _
  $region15: #{_lambda_.5} parent=0 // pred_check_branch
    %20 = sbr.rel (0) target = $region17
  $region16: #{_lambda_.5} parent=0 // pred_region
    _
  $region17: #{_lambda_.5} parent=0 // pred_fallthru
    _
  // Predicated region
  $region18: #{_lambda_.5} parent=0 // pred_check
    _
  $region19: #{_lambda_.5} parent=0 // pred_check_branch
    %22 = sbr.rel (0) target = $region21
  $region20: #{_lambda_.5} parent=0 // pred_region
    _
  $region21: #{_lambda_.5} parent=0 // pred_fallthru
    _
  // Predicated region
  $region22: #{_lambda_.5} parent=0 // pred_check
    _
  $region23: #{_lambda_.5} parent=0 // pred_check_branch
    %24 = sbr.rel (0) target = $region25
  $region24: #{_lambda_.5} parent=0 // pred_region
    _
  $region25: #{_lambda_.5} parent=0 // pred_fallthru
    _
  %v26 = vld [vmem:[%s0] sm:$0xf]
  %v27 = vld [vmem:[%s1] sm:$0xf]
  %v28 = vld [vmem:[%s1 + $0x4] sm:$0xf]
  %v29 = vld [vmem:[%s1 + $0x8] sm:$0xf]
  %v30 = vld [vmem:[%s1 + $0xc] sm:$0xf]
  %v31 = vld [vmem:[%s1 + $0x10] sm:$0xf]
  %v32 = vld [vmem:[%s1 + $0x14] sm:$0xf]
  %v33 = vld [vmem:[%s1 + $0x18] sm:$0xf]
  %v34 = vld [vmem:[%s1 + $0x1c] sm:$0xf]
  %v35 = vld [vmem:[%s1 + $0x20] sm:$0xf]
  %v36 = vld [vmem:[%s1 + $0x24] sm:$0xf]
  %v37 = vld [vmem:[%s1 + $0x28] sm:$0xf]
  %v38 = vld [vmem:[%s1 + $0x2c] sm:$0xf]
  %v39 = vld [vmem:[%s1 + $0x30] sm:$0xf]
  %v40 = vld [vmem:[%s1 + $0x34] sm:$0xf]
  %v41 = vld [vmem:[%s1 + $0x38] sm:$0xf]
  %v42 = vld [vmem:[%s1 + $0x3c] sm:$0xf]
  %v59 = vunpack.c.l.b16 %v27
  %v60 = vunpack.c.l.b16 %v28
  %v61 = vunpack.c.l.b16 %v29
  %v62 = vunpack.c.l.b16 %v30
  %v63 = vunpack.c.l.b16 %v31
  %v64 = vunpack.c.l.b16 %v32
  %v65 = vunpack.c.l.b16 %v33
  %v66 = vunpack.c.l.b16 %v34
  %v67 = vunpack.c.l.b16 %v35
  %v68 = vunpack.c.l.b16 %v36
  %v69 = vunpack.c.l.b16 %v37
  %v70 = vunpack.c.l.b16 %v38
  %v71 = vunpack.c.l.b16 %v39
  %v72 = vunpack.c.l.b16 %v40
  %v73 = vunpack.c.l.b16 %v41
  %v74 = vunpack.c.l.b16 %v42
  %v75 = vpack.c.b16 %v60, %v59
  %v76 = vpack.c.b16 %v62, %v61
  %v77 = vpack.c.b16 %v64, %v63
  %v78 = vpack.c.b16 %v66, %v65
  %v79 = vpack.c.b16 %v68, %v67
  %v80 = vpack.c.b16 %v70, %v69
  %v81 = vpack.c.b16 %v72, %v71
  %v82 = vpack.c.b16 %v74, %v73
  %91 = vmatprep.subr.bf16.mxu0 0
  %92 = vmatpush1.bf16.msra.mxu0 %v82
  %93 = vmatprep.subr.bf16.mxu0 0
  %94 = vmatpush1.bf16.msra.mxu0 %v81
  %95 = vmatprep.subr.bf16.mxu0 0
  %96 = vmatpush1.bf16.msra.mxu0 %v80
  %97 = vmatprep.subr.bf16.mxu0 0
  %98 = vmatpush1.bf16.msra.mxu0 %v79
  %99 = vmatprep.subr.bf16.mxu0 0
  %100 = vmatpush1.bf16.msra.mxu0 %v78
  %101 = vmatprep.subr.bf16.mxu0 0
  %102 = vmatpush1.bf16.msra.mxu0 %v77
  %103 = vmatprep.subr.bf16.mxu0 0
  %104 = vmatpush1.bf16.msra.mxu0 %v76
  %105 = vmatprep.subr.bf16.mxu0 0
  %106 = vmatpush1.bf16.msra.mxu0 %v75
  %107 = vmatprep.subr.bf16.mxu0 0
  %108 = vmatpush2.bf16.msra.mxu0 0
  %109 = vmatprep.subr.bf16.mxu0 0
  %110 = vmatpush2.bf16.msra.mxu0 0
  %111 = vmatprep.subr.bf16.mxu0 0
  %112 = vmatpush2.bf16.msra.mxu0 0
  %113 = vmatprep.subr.bf16.mxu0 0
  %114 = vmatpush2.bf16.msra.mxu0 0
  %115 = vmatprep.subr.bf16.mxu0 0
  %116 = vmatpush2.bf16.msra.mxu0 0
  %117 = vmatprep.subr.bf16.mxu0 0
  %118 = vmatpush2.bf16.msra.mxu0 0
  %119 = vmatprep.subr.bf16.mxu0 0
  %120 = vmatpush2.bf16.msra.mxu0 0
  %121 = vmatprep.subr.bf16.mxu0 0
  %122 = vmatpush2.bf16.msra.mxu0 0
  %123 = vmatprep.mubr.bf16.mxu0 0
  %124 = vmatmul.mubr.bf16.gmra.mxu0 %v26
  %v125 = vpop.f32.mrf.mxu0
  %v126 = vadd.f32 0.0, %v125
  %v127 = vpop.f32.mrf.mxu0
  %v128 = vpop.f32.mrf.mxu0
  %v129 = vpop.f32.mrf.mxu0
  %130 = vdwg.mxu0
  %s131 = smul.u32 0, 8
  %s132 = scalar_lea.vmem [#allocation2], %s131
  %vm133 = vcmask 64512
  %134 = vst.msk [vmem:[%s132] sm:$0xff] %vm133, %v126
  %p135 = scmp.eq.s32.totalorder 0, 0
  // Predicated region
  $region26: #{_lambda_.5} parent=0 // pred_check
    %p136 = pneg %p135
  $region27: #{_lambda_.5} parent=0 // pred_check_branch
    %138 = sbr.rel (%p136) target = $region29
  $region28: #{_lambda_.5} parent=0 // pred_region
    %v139 = vld [vmem:[#allocation2] sm:$0xff]
    %v140 = vlaneseq
    %v141 = vshrl.u32 %v140, 7
    %vm142 = vcmp.lt.s32.totalorder %v141, 8
    %v143 = vsel %vm142, 1, 0
    %v144 = vcvt.s32.f32 %v143
    %v145 = vmul.f32 %v139, %v144
    %v146 = vsel %vm133, %v145, 0.0
    %v147 = vrot.slane %v146, 4
    %v148 = vadd.f32 %v146, %v147
    %v149 = vrot.slane %v148, 2
    %v150 = vadd.f32 %v148, %v149
    %v151 = vrot.slane %v150, 1
    %v152 = vadd.f32 %v150, %v151
    %v153 = vmul.f32 %v152, 0.125
    %v154 = vsub.f32 %v139, %v153
    %v155 = vmul.f32 %v154, %v144
    %v156 = vmul.f32 %v155, %v155
    %v157 = vsel %vm133, %v156, 0.0
    %v158 = vrot.slane %v157, 4
    %v159 = vadd.f32 %v157, %v158
    %v160 = vrot.slane %v159, 2
    %v161 = vadd.f32 %v159, %v160
    %v162 = vrot.slane %v161, 1
    %v163 = vadd.f32 %v161, %v162
    %v164 = vmul.f32 %v163, 0.125
    %v165 = vadd.f32 %v164, 1e-05
    %v166 = vrsqrt.pop %v165
    %v167 = vld [vmem:[%s2] sm:$0x1]
    %v168 = vmul.f32 %v166, %v167
    %v169 = vld [vmem:[%s3] sm:$0x1]
    %v170 = vmul.f32 %v153, %v168
    %v171 = vsub.f32 %v169, %v170
    %v172 = vlaneseq
    %v173 = vshrl.u32 %v172, 7
    %v174 = vsub.s32 0, %v173
    %v175 = vrot.slane %v168, %v174
    %v176 = vmul.f32 %v139, %v175
    %v178 = vlaneseq
    %v179 = vshrl.u32 %v178, 7
    %v180 = vsub.s32 0, %v179
    %v181 = vrot.slane %v171, %v180
    %v183 = vadd.f32 %v176, %v181
    %vm184 = vcmp.ge.f32.partialorder %v183, 0.0
    %v185 = vmul.f32 %v183, 0.01
    %v186 = vsel %vm184, %v183, %v185
    %v187 = vld [vmem:[%s4] sm:$0x1]
    %v189 = vlaneseq
    %v190 = vshrl.u32 %v189, 7
    %v191 = vsub.s32 0, %v190
    %v192 = vrot.slane %v187, %v191
    %v194 = vmul.f32 %v186, %v192
    %v195 = vsel %vm133, %v194, 0.0
    %196 = vadd.xlane.f32.xlu0 %v195
    %v197 = vpop.xlane.xlu0 %196
    %v198 = vld [vmem:[#allocation3] sm:$0x1]
    %v200 = vlaneseq
    %v201 = vshrl.u32 %v200, 7
    %v202 = vsub.s32 0, %v201
    %v203 = vrot.slane %v198, %v202
    %v205 = vadd.f32 %v197, %v203
    %v206 = vsub.f32 0.0, %v205
    %v207 = vmul.f32 %v206, 1.442695
    %v208 = vpow.pop %v207
    %v209 = vadd.f32 %v208, 1.0
    %v210 = vrcp.pop %v209
    %v211 = vmul.f32 1.0, %v210
    %vm212 = vcmask 7168
    %213 = vst.msk [vmem:[%s6] sm:$0xff] %vm212, %v211
  $region29: #{_lambda_.5} parent=0 // pred_fallthru
    _
  // Predicated region
  $region30: #{_lambda_.5} parent=0 // pred_check
    _
  $region31: #{_lambda_.5} parent=0 // pred_check_branch
    %215 = sbr.rel (0) target = $region33
  $region32: #{_lambda_.5} parent=0 // pred_region
    _
  $region33: #{_lambda_.5} parent=0 // pred_fallthru
    _
  // Predicated region
  $region34: #{_lambda_.5} parent=0 // pred_check
    _
  $region35: #{_lambda_.5} parent=0 // pred_check_branch
    %217 = sbr.rel (0) target = $region37
  $region36: #{_lambda_.5} parent=0 // pred_region
    _
  $region37: #{_lambda_.5} parent=0 // pred_fallthru
    _

</llo_original>
